<compile_context>
chip_gen: v7x
topology: tpu7x:2x2x1
jax: 0.10.0
libtpu: 0.0.40
codegen_flags: <defaults>
</compile_context>

<pallas_src>
import functools

import numpy as np
import jax
import jax.numpy as jnp
from jax import lax
from jax.experimental import pallas as pl
from jax.experimental.pallas import tpu as pltpu

# ---------------- config (small, consistent with QWenConfig fields) ----------------
VOCAB = 128
HIDDEN = 64
NUM_HEADS = 4
HEAD_DIM = HIDDEN // NUM_HEADS          # 16
INTERMEDIATE = 256                      # config.intermediate_size
MLP_INTER = INTERMEDIATE // 2           # QWenMLP uses intermediate_size // 2 -> 128
NUM_LAYERS = 2
SEQ = 8
EPS = 1e-6                              # layer_norm_epsilon
ROPE_THETA = 10000.0
PARAM_DTYPE = jnp.bfloat16              # MXU-native weight dtype (f32 accumulation)


# ---------------- RoPE helpers (built once, outside the layer loop) ----------------
def make_rope_rotation_matrix():
    """[H, H] matrix R with x @ R == per-head neox rotate_half(x) on the flat layout."""
    half = HEAD_DIM // 2
    R = np.zeros((HIDDEN, HIDDEN), np.float32)
    for h in range(NUM_HEADS):
        base = h * HEAD_DIM
        for j in range(half):
            R[base + half + j, base + j] = -1.0   # out first half gets -x2
            R[base + j, base + half + j] = 1.0    # out second half gets +x1
    return jnp.asarray(R)


def rope_tables(positions):
    """cos/sin broadcast to the flat [S, H] per-head layout (neox style)."""
    half = HEAD_DIM // 2
    inv_freq = 1.0 / (ROPE_THETA ** (jnp.arange(0, HEAD_DIM, 2, dtype=jnp.float32)
                                     / HEAD_DIM))
    t = positions.astype(jnp.float32)[:, None] * inv_freq[None, :]      # [S, half]
    cos = jnp.cos(t)
    sin = jnp.sin(t)
    cos_full = jnp.tile(jnp.concatenate([cos, cos], axis=-1), (1, NUM_HEADS))  # [S, H]
    sin_full = jnp.tile(jnp.concatenate([sin, sin], axis=-1), (1, NUM_HEADS))
    return cos_full, sin_full


# ---------------- fused whole-forward kernel (single invocation) ----------------
def _qwen_forward_kernel(h0_ref, cos_ref, sin_ref, rope_r_ref, bd_mask_ref, attn_bias_ref,
                         ln1_ref, ln2_ref, wq_ref, bq_ref, wk_ref, bk_ref, wv_ref, bv_ref,
                         wc_ref, gate_up_ref, down_ref, lnf_ref,
                         out_ref, *, eps, num_layers, num_heads, seq, mlp_inter):
    f32 = jnp.float32
    bf16 = jnp.bfloat16

    def rmsnorm(x, w):
        var = jnp.mean(x * x, axis=-1, keepdims=True)
        return x * lax.rsqrt(var + eps) * w

    def mm(x, w, b=None):
        acc = jnp.dot(x.astype(w.dtype), w, preferred_element_type=f32)
        return acc if b is None else acc + b

    # constants hoisted once (shared by all layers)
    cosf = cos_ref[...]                 # [S, H] f32
    sinf = sin_ref[...]                 # [S, H] f32
    rope_r = rope_r_ref[...]            # [H, H] bf16, +/-1 permutation
    bd_mask = bd_mask_ref[...]          # [NH*S, H] f32, block-diagonal head mask
    attn_bias = attn_bias_ref[...]      # [NH*S, S] f32, additive causal mask

    h = h0_ref[...].astype(f32)
    res = jnp.zeros_like(h)

    for l in range(num_layers):
        # ---- ln_1 (fused residual add, vLLM semantics) ----
        x = h + res
        res = x
        hn = rmsnorm(x, ln1_ref[l])                                       # [S, H] f32

        # ---- QKV: three lane-aligned matmuls (scale pre-folded into wq/bq) ----
        q = mm(hn, wq_ref[l], bq_ref[l])                                  # [S, H] f32
        k = mm(hn, wk_ref[l], bk_ref[l])
        v = mm(hn, wv_ref[l], bv_ref[l])

        # ---- RoPE (neox rotate-half via +/-1 permutation matmul; linear -> scale ok)
        q = q * cosf + mm(q, rope_r) * sinf
        k = k * cosf + mm(k, rope_r) * sinf

        # ---- attention: all heads in one matmul + one softmax chain ----
        # Rows of the stacked view are (head, query): q is replicated along sublanes
        # (aligned concat at multiples of 8) and masked to each head's 16-lane block,
        # so a single contraction over H yields every head's scores (zeros kill the
        # cross-head terms).
        q_st = jnp.concatenate([q] * num_heads, axis=0) * bd_mask         # [NH*S, H]
        s = lax.dot_general(q_st.astype(bf16), k.astype(bf16),
                            (((1,), (1,)), ((), ())),
                            preferred_element_type=f32)                   # [NH*S, S]
        s = s + attn_bias                                                 # causal mask
        m = jnp.max(s, axis=-1, keepdims=True)
        e = jnp.exp(s - m)
        p = e * pl.reciprocal(jnp.sum(e, axis=-1, keepdims=True), approx=True)

        # single P.V matmul; mask each (head,query) row to its own head lanes and
        # collapse the head-row blocks back to flat [S, H] with aligned sublane slices.
        pv = jnp.dot(p.astype(bf16), v.astype(bf16),
                     preferred_element_type=f32) * bd_mask                # [NH*S, H]
        attn = pv[0:seq]
        for hh in range(1, num_heads):
            attn = attn + pv[hh * seq:(hh + 1) * seq]                     # [S, H]

        # ---- c_proj (no bias) ----
        attn_out = mm(attn, wc_ref[l])                                    # [S, H]

        # ---- ln_2 (fused residual add) ----
        x2 = attn_out + res
        res = x2
        hn2 = rmsnorm(x2, ln2_ref[l])

        # ---- MLP: gate_up -> SiLU*up -> down (gate/up split is 128-lane aligned) ----
        gu = mm(hn2, gate_up_ref[l])                                      # [S, 2*MI]
        gate = gu[:, :mlp_inter]
        up = gu[:, mlp_inter:]
        h = mm(gate * jax.nn.sigmoid(gate) * up, down_ref[l])             # [S, H]

    # ---- final ln_f ----
    out_ref[...] = rmsnorm(h + res, lnf_ref[...]).astype(out_ref.dtype)


def qwen_forward(prep, input_ids, positions, kv_caches=None):
    # TODO(synk): paged KV-cache write/read (decode path) not implemented; prefill only.
    del kv_caches
    h0 = jnp.take(prep['wte'], input_ids, axis=0)          # same jit => one XLA launch
    cos_full, sin_full = rope_tables(positions)
    S, H = h0.shape

    inputs = (h0, cos_full, sin_full, prep['rope_R'], prep['bd_mask'], prep['attn_bias'],
              prep['ln1'], prep['ln2'], prep['wq'], prep['bq'], prep['wk'], prep['bk'],
              prep['wv'], prep['bv'], prep['c_proj_w'], prep['gate_up_w'],
              prep['mlp_down_w'], prep['ln_f'])

    vmem = pltpu.MemorySpace.VMEM
    return pl.pallas_call(
        functools.partial(_qwen_forward_kernel, eps=EPS, num_layers=NUM_LAYERS,
                          num_heads=NUM_HEADS, seq=S, mlp_inter=MLP_INTER),
        out_shape=jax.ShapeDtypeStruct((S, H), jnp.float32),
        in_specs=[pl.BlockSpec(memory_space=vmem) for _ in inputs],   # whole arrays in VMEM
        out_specs=pl.BlockSpec(memory_space=vmem),
    )(*inputs)


# ---------------- parameter prep for the kernel layout ----------------
def prepare_kernel_params(params):
    """Split c_attn into lane-aligned Q/K/V slabs, fold the attention scale into Q
    (exact: scale = 0.25), and precompute the block-diag head mask / causal bias."""
    scale = HEAD_DIM ** -0.5
    H = HIDDEN
    caw = params['c_attn_w']                                   # [L, H, 3H] bf16
    cab = params['c_attn_b']                                   # [L, 1, 3H] f32
    wq = (caw[:, :, :H].astype(jnp.float32) * scale).astype(PARAM_DTYPE)
    wk = caw[:, :, H:2 * H]
    wv = caw[:, :, 2 * H:]
    bq = cab[:, :, :H] * scale
    bk = cab[:, :, H:2 * H]
    bv = cab[:, :, 2 * H:]

    # block-diagonal head mask [NH*S, H]: row block h sees only head h's 16 lanes
    bd = np.zeros((NUM_HEADS * SEQ, HIDDEN), np.float32)
    for h in range(NUM_HEADS):
        bd[h * SEQ:(h + 1) * SEQ, h * HEAD_DIM:(h + 1) * HEAD_DIM] = 1.0

    # additive causal mask [NH*S, S]
    causal = np.where(np.tril(np.ones((SEQ, SEQ), np.float32)) > 0, 0.0, -1e30)
    attn_bias = np.tile(causal.astype(np.float32), (NUM_HEADS, 1))

    return {
        'wte': params['wte'], 'ln_f': params['ln_f'],
        'ln1': params['ln1'], 'ln2': params['ln2'],
        'wq': wq, 'wk': wk, 'wv': wv, 'bq': bq, 'bk': bk, 'bv': bv,
        'c_proj_w': params['c_proj_w'], 'gate_up_w': params['gate_up_w'],
        'mlp_down_w': params['mlp_down_w'], 'rope_R': params['rope_R'],
        'bd_mask': jnp.asarray(bd), 'attn_bias': jnp.asarray(attn_bias),
    }


# ---------------- pure-JAX reference (module semantics, same precision policy) ----------------
def _rmsnorm_ref(x, w, eps=EPS):
    var = jnp.mean(x * x, axis=-1, keepdims=True)
    return x * lax.rsqrt(var + eps) * w


def qwen_forward_ref(params, input_ids, positions):
    bf16 = jnp.bfloat16
    f32 = jnp.float32
    h = jnp.take(params['wte'], input_ids, axis=0).astype(f32)
    res = jnp.zeros_like(h)
    cosf, sinf = rope_tables(positions)
    R = params['rope_R']
    scale = HEAD_DIM ** -0.5
    for l in range(NUM_LAYERS):
        x = h + res
        res = x
        hn = _rmsnorm_ref(x, params['ln1'][l, 0])
        qkv = jnp.dot(hn.astype(bf16), params['c_attn_w'][l],
                      preferred_element_type=f32) + params['c_attn_b'][l, 0]
        q, k, v = jnp.split(qkv, 3, axis=-1)
        q = q * scale
        q = q * cosf + jnp.dot(q.astype(bf16), R, preferred_element_type=f32) * sinf
        k = k * cosf + jnp.dot(k.astype(bf16), R, preferred_element_type=f32) * sinf
        qh = q.reshape(SEQ, NUM_HEADS, HEAD_DIM).transpose(1, 0, 2).astype(bf16)
        kh = k.reshape(SEQ, NUM_HEADS, HEAD_DIM).transpose(1, 0, 2).astype(bf16)
        vh = v.reshape(SEQ, NUM_HEADS, HEAD_DIM).transpose(1, 0, 2).astype(bf16)
        s = jnp.einsum('hqd,hkd->hqk', qh, kh, preferred_element_type=f32)
        mask = jnp.tril(jnp.ones((SEQ, SEQ), bool))
        s = jnp.where(mask[None], s, -1e30)
        p = jax.nn.softmax(s, axis=-1)
        o = jnp.einsum('hqk,hkd->hqd', p.astype(bf16), vh, preferred_element_type=f32)
        o = o.transpose(1, 0, 2).reshape(SEQ, HIDDEN)
        attn_out = jnp.dot(o.astype(bf16), params['c_proj_w'][l],
                           preferred_element_type=f32)
        x2 = attn_out + res
        res = x2
        hn2 = _rmsnorm_ref(x2, params['ln2'][l, 0])
        gu = jnp.dot(hn2.astype(bf16), params['gate_up_w'][l], preferred_element_type=f32)
        gate, up = gu[:, :MLP_INTER], gu[:, MLP_INTER:]
        h = jnp.dot((gate * jax.nn.sigmoid(gate) * up).astype(bf16),
                    params['mlp_down_w'][l], preferred_element_type=f32)
    return _rmsnorm_ref(h + res, params['ln_f'][0])


# ---------------- deterministic parameter init (stacked per-layer weights) ----------------
def init_params(key):
    scale = 0.02
    keys = jax.random.split(key, 6)

    def w(k, shape):
        return jax.random.normal(k, shape, jnp.float32) * scale

    return {
        'wte': w(keys[0], (VOCAB, HIDDEN)),
        'ln_f': jnp.ones((1, HIDDEN), jnp.float32),
        'ln1': jnp.ones((NUM_LAYERS, 1, HIDDEN), jnp.float32),
        'ln2': jnp.ones((NUM_LAYERS, 1, HIDDEN), jnp.float32),
        'c_attn_w': w(keys[1], (NUM_LAYERS, HIDDEN, 3 * HIDDEN)).astype(PARAM_DTYPE),
        'c_attn_b': w(keys[2], (NUM_LAYERS, 1, 3 * HIDDEN)),
        'c_proj_w': w(keys[3], (NUM_LAYERS, HIDDEN, HIDDEN)).astype(PARAM_DTYPE),
        'gate_up_w': w(keys[4], (NUM_LAYERS, HIDDEN, 2 * MLP_INTER)).astype(PARAM_DTYPE),
        'mlp_down_w': w(keys[5], (NUM_LAYERS, MLP_INTER, HIDDEN)).astype(PARAM_DTYPE),
        'rope_R': make_rope_rotation_matrix().astype(PARAM_DTYPE),   # +/-1, exact in bf16
    }


if __name__ == "__main__":
    root = jax.random.PRNGKey(0)
    k_params, k_ids = jax.random.split(root)
    params = init_params(k_params)
    prep = prepare_kernel_params(params)

    input_ids = jax.random.randint(k_ids, (SEQ,), 0, VOCAB, dtype=jnp.int32)
    positions = jnp.arange(SEQ, dtype=jnp.int32)
    # dummy (unused) KV caches, one per layer, to mirror the torch signature
    kv_caches = [(jnp.zeros((1, NUM_HEADS, SEQ, HEAD_DIM), jnp.float32),
                  jnp.zeros((1, NUM_HEADS, SEQ, HEAD_DIM), jnp.float32))
                 for _ in range(NUM_LAYERS)]

    fwd = jax.jit(lambda p, ids, pos: qwen_forward(p, ids, pos, kv_caches))
    hidden_states = fwd(prep, input_ids, positions)
    jax.block_until_ready(hidden_states)
    assert hidden_states.shape == (SEQ, HIDDEN)

    ref = qwen_forward_ref(params, input_ids, positions)
    max_err = float(jnp.max(jnp.abs(hidden_states - ref)))
    assert max_err < 5e-2, f"kernel vs reference mismatch: max |diff| = {max_err}"

    print("KERNEL_OK")
</pallas_src>

<mosaic_0001>
module attributes {stable_mosaic.version = 11 : i64} {
  func.func @_qwen_forward_kernel(%arg0: memref<8x64xf32, #tpu.memory_space<vmem>>, %arg1: memref<8x64xf32, #tpu.memory_space<vmem>>, %arg2: memref<8x64xf32, #tpu.memory_space<vmem>>, %arg3: memref<64x64xbf16, #tpu.memory_space<vmem>>, %arg4: memref<32x64xf32, #tpu.memory_space<vmem>>, %arg5: memref<32x8xf32, #tpu.memory_space<vmem>>, %arg6: memref<2x1x64xf32, #tpu.memory_space<vmem>>, %arg7: memref<2x1x64xf32, #tpu.memory_space<vmem>>, %arg8: memref<2x64x64xbf16, #tpu.memory_space<vmem>>, %arg9: memref<2x1x64xf32, #tpu.memory_space<vmem>>, %arg10: memref<2x64x64xbf16, #tpu.memory_space<vmem>>, %arg11: memref<2x1x64xf32, #tpu.memory_space<vmem>>, %arg12: memref<2x64x64xbf16, #tpu.memory_space<vmem>>, %arg13: memref<2x1x64xf32, #tpu.memory_space<vmem>>, %arg14: memref<2x64x64xbf16, #tpu.memory_space<vmem>>, %arg15: memref<2x64x256xbf16, #tpu.memory_space<vmem>>, %arg16: memref<2x128x64xbf16, #tpu.memory_space<vmem>>, %arg17: memref<1x64xf32, #tpu.memory_space<vmem>>, %arg18: memref<8x64xf32, #tpu.memory_space<vmem>>) attributes {dimension_semantics = [], scalar_prefetch = 0 : i64, scratch_operands = 0 : i64, tpu.core_type = #tpu.core_type<tc>} {
    %c0 = arith.constant 0 : index
    %c0_0 = arith.constant 0 : index
    %0 = vector.load %arg1[%c0, %c0_0] : memref<8x64xf32, #tpu.memory_space<vmem>>, vector<8x64xf32>
    %c0_1 = arith.constant 0 : index
    %c0_2 = arith.constant 0 : index
    %1 = vector.load %arg2[%c0_1, %c0_2] : memref<8x64xf32, #tpu.memory_space<vmem>>, vector<8x64xf32>
    %c0_3 = arith.constant 0 : index
    %c0_4 = arith.constant 0 : index
    %2 = vector.load %arg3[%c0_3, %c0_4] : memref<64x64xbf16, #tpu.memory_space<vmem>>, vector<64x64xbf16>
    %c0_5 = arith.constant 0 : index
    %c0_6 = arith.constant 0 : index
    %3 = vector.load %arg4[%c0_5, %c0_6] : memref<32x64xf32, #tpu.memory_space<vmem>>, vector<32x64xf32>
    %c0_7 = arith.constant 0 : index
    %c0_8 = arith.constant 0 : index
    %4 = vector.load %arg5[%c0_7, %c0_8] : memref<32x8xf32, #tpu.memory_space<vmem>>, vector<32x8xf32>
    %c0_9 = arith.constant 0 : index
    %c0_10 = arith.constant 0 : index
    %5 = vector.load %arg0[%c0_9, %c0_10] : memref<8x64xf32, #tpu.memory_space<vmem>>, vector<8x64xf32>
    %cst = arith.constant 0.000000e+00 : f32
    %6 = vector.broadcast %cst : f32 to vector<8x64xf32>
    %7 = arith.addf %5, %6 : vector<8x64xf32>
    %c0_11 = arith.constant 0 : index
    %c0_12 = arith.constant 0 : index
    %c0_13 = arith.constant 0 : index
    %8 = vector.load %arg6[%c0_11, %c0_12, %c0_13] : memref<2x1x64xf32, #tpu.memory_space<vmem>>, vector<1x1x64xf32>
    %9 = vector.shape_cast %8 : vector<1x1x64xf32> to vector<1x64xf32>
    %10 = arith.mulf %7, %7 : vector<8x64xf32>
    %cst_14 = arith.constant dense<0.000000e+00> : vector<8xf32>
    %11 = vector.multi_reduction <add>, %10, %cst_14 [1] : vector<8x64xf32> to vector<8xf32>
    %12 = vector.shape_cast %11 : vector<8xf32> to vector<8x1xf32>
    %cst_15 = arith.constant 6.400000e+01 : f32
    %13 = vector.broadcast %cst_15 : f32 to vector<8x1xf32>
    %14 = arith.divf %12, %13 : vector<8x1xf32>
    %cst_16 = arith.constant 9.99999997E-7 : f32
    %15 = vector.broadcast %cst_16 : f32 to vector<8x1xf32>
    %16 = arith.addf %14, %15 : vector<8x1xf32>
    %17 = math.rsqrt %16 : vector<8x1xf32>
    %18 = vector.broadcast %17 : vector<8x1xf32> to vector<8x64xf32>
    %19 = arith.mulf %7, %18 : vector<8x64xf32>
    %20 = vector.broadcast %9 : vector<1x64xf32> to vector<8x64xf32>
    %21 = arith.mulf %19, %20 : vector<8x64xf32>
    %c0_17 = arith.constant 0 : index
    %c0_18 = arith.constant 0 : index
    %c0_19 = arith.constant 0 : index
    %22 = vector.load %arg8[%c0_17, %c0_18, %c0_19] : memref<2x64x64xbf16, #tpu.memory_space<vmem>>, vector<1x64x64xbf16>
    %23 = vector.shape_cast %22 : vector<1x64x64xbf16> to vector<64x64xbf16>
    %c0_20 = arith.constant 0 : index
    %c0_21 = arith.constant 0 : index
    %c0_22 = arith.constant 0 : index
    %24 = vector.load %arg9[%c0_20, %c0_21, %c0_22] : memref<2x1x64xf32, #tpu.memory_space<vmem>>, vector<1x1x64xf32>
    %25 = vector.shape_cast %24 : vector<1x1x64xf32> to vector<1x64xf32>
    %26 = arith.truncf %21 : vector<8x64xf32> to vector<8x64xbf16>
    %cst_23 = arith.constant dense<0.000000e+00> : vector<8x64xf32>
    %27 = tpu.matmul %26, %23, %cst_23 {dimension_numbers = #tpu.dot_dimension_numbers<[1], [0], [0], [1], [0, 0, 1, 1], [], []>} : vector<8x64xbf16>, vector<64x64xbf16>, vector<8x64xf32> -> vector<8x64xf32>
    %28 = vector.broadcast %25 : vector<1x64xf32> to vector<8x64xf32>
    %29 = arith.addf %27, %28 : vector<8x64xf32>
    %c0_24 = arith.constant 0 : index
    %c0_25 = arith.constant 0 : index
    %c0_26 = arith.constant 0 : index
    %30 = vector.load %arg10[%c0_24, %c0_25, %c0_26] : memref<2x64x64xbf16, #tpu.memory_space<vmem>>, vector<1x64x64xbf16>
    %31 = vector.shape_cast %30 : vector<1x64x64xbf16> to vector<64x64xbf16>
    %c0_27 = arith.constant 0 : index
    %c0_28 = arith.constant 0 : index
    %c0_29 = arith.constant 0 : index
    %32 = vector.load %arg11[%c0_27, %c0_28, %c0_29] : memref<2x1x64xf32, #tpu.memory_space<vmem>>, vector<1x1x64xf32>
    %33 = vector.shape_cast %32 : vector<1x1x64xf32> to vector<1x64xf32>
    %34 = arith.truncf %21 : vector<8x64xf32> to vector<8x64xbf16>
    %cst_30 = arith.constant dense<0.000000e+00> : vector<8x64xf32>
    %35 = tpu.matmul %34, %31, %cst_30 {dimension_numbers = #tpu.dot_dimension_numbers<[1], [0], [0], [1], [0, 0, 1, 1], [], []>} : vector<8x64xbf16>, vector<64x64xbf16>, vector<8x64xf32> -> vector<8x64xf32>
    %36 = vector.broadcast %33 : vector<1x64xf32> to vector<8x64xf32>
    %37 = arith.addf %35, %36 : vector<8x64xf32>
    %c0_31 = arith.constant 0 : index
    %c0_32 = arith.constant 0 : index
    %c0_33 = arith.constant 0 : index
    %38 = vector.load %arg12[%c0_31, %c0_32, %c0_33] : memref<2x64x64xbf16, #tpu.memory_space<vmem>>, vector<1x64x64xbf16>
    %39 = vector.shape_cast %38 : vector<1x64x64xbf16> to vector<64x64xbf16>
    %c0_34 = arith.constant 0 : index
    %c0_35 = arith.constant 0 : index
    %c0_36 = arith.constant 0 : index
    %40 = vector.load %arg13[%c0_34, %c0_35, %c0_36] : memref<2x1x64xf32, #tpu.memory_space<vmem>>, vector<1x1x64xf32>
    %41 = vector.shape_cast %40 : vector<1x1x64xf32> to vector<1x64xf32>
    %42 = arith.truncf %21 : vector<8x64xf32> to vector<8x64xbf16>
    %cst_37 = arith.constant dense<0.000000e+00> : vector<8x64xf32>
    %43 = tpu.matmul %42, %39, %cst_37 {dimension_numbers = #tpu.dot_dimension_numbers<[1], [0], [0], [1], [0, 0, 1, 1], [], []>} : vector<8x64xbf16>, vector<64x64xbf16>, vector<8x64xf32> -> vector<8x64xf32>
    %44 = vector.broadcast %41 : vector<1x64xf32> to vector<8x64xf32>
    %45 = arith.addf %43, %44 : vector<8x64xf32>
    %46 = arith.mulf %29, %0 : vector<8x64xf32>
    %47 = arith.truncf %29 : vector<8x64xf32> to vector<8x64xbf16>
    %cst_38 = arith.constant dense<0.000000e+00> : vector<8x64xf32>
    %48 = tpu.matmul %47, %2, %cst_38 {dimension_numbers = #tpu.dot_dimension_numbers<[1], [0], [0], [1], [0, 0, 1, 1], [], []>} : vector<8x64xbf16>, vector<64x64xbf16>, vector<8x64xf32> -> vector<8x64xf32>
    %49 = arith.mulf %48, %1 : vector<8x64xf32>
    %50 = arith.addf %46, %49 : vector<8x64xf32>
    %51 = arith.mulf %37, %0 : vector<8x64xf32>
    %52 = arith.truncf %37 : vector<8x64xf32> to vector<8x64xbf16>
    %cst_39 = arith.constant dense<0.000000e+00> : vector<8x64xf32>
    %53 = tpu.matmul %52, %2, %cst_39 {dimension_numbers = #tpu.dot_dimension_numbers<[1], [0], [0], [1], [0, 0, 1, 1], [], []>} : vector<8x64xbf16>, vector<64x64xbf16>, vector<8x64xf32> -> vector<8x64xf32>
    %54 = arith.mulf %53, %1 : vector<8x64xf32>
    %55 = arith.addf %51, %54 : vector<8x64xf32>
    %56 = tpu.concatenate %50, %50, %50, %50 in 0 : vector<8x64xf32>, vector<8x64xf32>, vector<8x64xf32>, vector<8x64xf32> -> vector<32x64xf32>
    %57 = arith.mulf %56, %3 : vector<32x64xf32>
    %58 = arith.truncf %57 : vector<32x64xf32> to vector<32x64xbf16>
    %59 = arith.truncf %55 : vector<8x64xf32> to vector<8x64xbf16>
    %cst_40 = arith.constant dense<0.000000e+00> : vector<32x8xf32>
    %60 = tpu.matmul %58, %59, %cst_40 {dimension_numbers = #tpu.dot_dimension_numbers<[1], [1], [0], [0], [0, 0, 1, 0], [], []>} : vector<32x64xbf16>, vector<8x64xbf16>, vector<32x8xf32> -> vector<32x8xf32>
    %61 = arith.addf %60, %4 : vector<32x8xf32>
    %cst_41 = arith.constant dense<0xFF800000> : vector<32xf32>
    %62 = vector.multi_reduction <maximumf>, %61, %cst_41 [1] : vector<32x8xf32> to vector<32xf32>
    %63 = vector.shape_cast %62 : vector<32xf32> to vector<32x1xf32>
    %64 = vector.broadcast %63 : vector<32x1xf32> to vector<32x8xf32>
    %65 = arith.subf %61, %64 : vector<32x8xf32>
    %66 = math.exp %65 : vector<32x8xf32>
    %cst_42 = arith.constant dense<0.000000e+00> : vector<32xf32>
    %67 = vector.multi_reduction <add>, %66, %cst_42 [1] : vector<32x8xf32> to vector<32xf32>
    %68 = vector.shape_cast %67 : vector<32xf32> to vector<32x1xf32>
    %69 = tpu.reciprocal %68 {approx = true} : vector<32x1xf32> -> vector<32x1xf32>
    %70 = vector.broadcast %69 : vector<32x1xf32> to vector<32x8xf32>
    %71 = arith.mulf %66, %70 : vector<32x8xf32>
    %72 = arith.truncf %71 : vector<32x8xf32> to vector<32x8xbf16>
    %73 = arith.truncf %45 : vector<8x64xf32> to vector<8x64xbf16>
    %cst_43 = arith.constant dense<0.000000e+00> : vector<32x64xf32>
    %74 = tpu.matmul %72, %73, %cst_43 {dimension_numbers = #tpu.dot_dimension_numbers<[1], [0], [0], [1], [0, 0, 1, 1], [], []>} : vector<32x8xbf16>, vector<8x64xbf16>, vector<32x64xf32> -> vector<32x64xf32>
    %75 = arith.mulf %74, %3 : vector<32x64xf32>
    %76 = vector.extract_strided_slice %75 {offsets = [0, 0], sizes = [8, 64], strides = [1, 1]} : vector<32x64xf32> to vector<8x64xf32>
    %77 = vector.extract_strided_slice %75 {offsets = [8, 0], sizes = [8, 64], strides = [1, 1]} : vector<32x64xf32> to vector<8x64xf32>
    %78 = arith.addf %76, %77 : vector<8x64xf32>
    %79 = vector.extract_strided_slice %75 {offsets = [16, 0], sizes = [8, 64], strides = [1, 1]} : vector<32x64xf32> to vector<8x64xf32>
    %80 = arith.addf %78, %79 : vector<8x64xf32>
    %81 = vector.extract_strided_slice %75 {offsets = [24, 0], sizes = [8, 64], strides = [1, 1]} : vector<32x64xf32> to vector<8x64xf32>
    %82 = arith.addf %80, %81 : vector<8x64xf32>
    %c0_44 = arith.constant 0 : index
    %c0_45 = arith.constant 0 : index
    %c0_46 = arith.constant 0 : index
    %83 = vector.load %arg14[%c0_44, %c0_45, %c0_46] : memref<2x64x64xbf16, #tpu.memory_space<vmem>>, vector<1x64x64xbf16>
    %84 = vector.shape_cast %83 : vector<1x64x64xbf16> to vector<64x64xbf16>
    %85 = arith.truncf %82 : vector<8x64xf32> to vector<8x64xbf16>
    %cst_47 = arith.constant dense<0.000000e+00> : vector<8x64xf32>
    %86 = tpu.matmul %85, %84, %cst_47 {dimension_numbers = #tpu.dot_dimension_numbers<[1], [0], [0], [1], [0, 0, 1, 1], [], []>} : vector<8x64xbf16>, vector<64x64xbf16>, vector<8x64xf32> -> vector<8x64xf32>
    %87 = arith.addf %86, %7 : vector<8x64xf32>
    %c0_48 = arith.constant 0 : index
    %c0_49 = arith.constant 0 : index
    %c0_50 = arith.constant 0 : index
    %88 = vector.load %arg7[%c0_48, %c0_49, %c0_50] : memref<2x1x64xf32, #tpu.memory_space<vmem>>, vector<1x1x64xf32>
    %89 = vector.shape_cast %88 : vector<1x1x64xf32> to vector<1x64xf32>
    %90 = arith.mulf %87, %87 : vector<8x64xf32>
    %cst_51 = arith.constant dense<0.000000e+00> : vector<8xf32>
    %91 = vector.multi_reduction <add>, %90, %cst_51 [1] : vector<8x64xf32> to vector<8xf32>
    %92 = vector.shape_cast %91 : vector<8xf32> to vector<8x1xf32>
    %cst_52 = arith.constant 6.400000e+01 : f32
    %93 = vector.broadcast %cst_52 : f32 to vector<8x1xf32>
    %94 = arith.divf %92, %93 : vector<8x1xf32>
    %cst_53 = arith.constant 9.99999997E-7 : f32
    %95 = vector.broadcast %cst_53 : f32 to vector<8x1xf32>
    %96 = arith.addf %94, %95 : vector<8x1xf32>
    %97 = math.rsqrt %96 : vector<8x1xf32>
    %98 = vector.broadcast %97 : vector<8x1xf32> to vector<8x64xf32>
    %99 = arith.mulf %87, %98 : vector<8x64xf32>
    %100 = vector.broadcast %89 : vector<1x64xf32> to vector<8x64xf32>
    %101 = arith.mulf %99, %100 : vector<8x64xf32>
    %c0_54 = arith.constant 0 : index
    %c0_55 = arith.constant 0 : index
    %c0_56 = arith.constant 0 : index
    %102 = vector.load %arg15[%c0_54, %c0_55, %c0_56] : memref<2x64x256xbf16, #tpu.memory_space<vmem>>, vector<1x64x256xbf16>
    %103 = vector.shape_cast %102 : vector<1x64x256xbf16> to vector<64x256xbf16>
    %104 = arith.truncf %101 : vector<8x64xf32> to vector<8x64xbf16>
    %cst_57 = arith.constant dense<0.000000e+00> : vector<8x256xf32>
    %105 = tpu.matmul %104, %103, %cst_57 {dimension_numbers = #tpu.dot_dimension_numbers<[1], [0], [0], [1], [0, 0, 1, 1], [], []>} : vector<8x64xbf16>, vector<64x256xbf16>, vector<8x256xf32> -> vector<8x256xf32>
    %106 = vector.extract_strided_slice %105 {offsets = [0, 0], sizes = [8, 128], strides = [1, 1]} : vector<8x256xf32> to vector<8x128xf32>
    %107 = vector.extract_strided_slice %105 {offsets = [0, 128], sizes = [8, 128], strides = [1, 1]} : vector<8x256xf32> to vector<8x128xf32>
    %108 = arith.negf %106 : vector<8x128xf32>
    %109 = math.exp %108 : vector<8x128xf32>
    %cst_58 = arith.constant 1.000000e+00 : f32
    %110 = vector.broadcast %cst_58 : f32 to vector<8x128xf32>
    %111 = arith.addf %110, %109 : vector<8x128xf32>
    %112 = arith.divf %110, %111 : vector<8x128xf32>
    %113 = arith.mulf %106, %112 : vector<8x128xf32>
    %114 = arith.mulf %113, %107 : vector<8x128xf32>
    %c0_59 = arith.constant 0 : index
    %c0_60 = arith.constant 0 : index
    %c0_61 = arith.constant 0 : index
    %115 = vector.load %arg16[%c0_59, %c0_60, %c0_61] : memref<2x128x64xbf16, #tpu.memory_space<vmem>>, vector<1x128x64xbf16>
    %116 = vector.shape_cast %115 : vector<1x128x64xbf16> to vector<128x64xbf16>
    %117 = arith.truncf %114 : vector<8x128xf32> to vector<8x128xbf16>
    %cst_62 = arith.constant dense<0.000000e+00> : vector<8x64xf32>
    %118 = tpu.matmul %117, %116, %cst_62 {dimension_numbers = #tpu.dot_dimension_numbers<[1], [0], [0], [1], [0, 0, 1, 1], [], []>} : vector<8x128xbf16>, vector<128x64xbf16>, vector<8x64xf32> -> vector<8x64xf32>
    %119 = arith.addf %118, %87 : vector<8x64xf32>
    %c1 = arith.constant 1 : index
    %c0_63 = arith.constant 0 : index
    %c0_64 = arith.constant 0 : index
    %120 = vector.load %arg6[%c1, %c0_63, %c0_64] : memref<2x1x64xf32, #tpu.memory_space<vmem>>, vector<1x1x64xf32>
    %121 = vector.shape_cast %120 : vector<1x1x64xf32> to vector<1x64xf32>
    %122 = arith.mulf %119, %119 : vector<8x64xf32>
    %cst_65 = arith.constant dense<0.000000e+00> : vector<8xf32>
    %123 = vector.multi_reduction <add>, %122, %cst_65 [1] : vector<8x64xf32> to vector<8xf32>
    %124 = vector.shape_cast %123 : vector<8xf32> to vector<8x1xf32>
    %cst_66 = arith.constant 6.400000e+01 : f32
    %125 = vector.broadcast %cst_66 : f32 to vector<8x1xf32>
    %126 = arith.divf %124, %125 : vector<8x1xf32>
    %cst_67 = arith.constant 9.99999997E-7 : f32
    %127 = vector.broadcast %cst_67 : f32 to vector<8x1xf32>
    %128 = arith.addf %126, %127 : vector<8x1xf32>
    %129 = math.rsqrt %128 : vector<8x1xf32>
    %130 = vector.broadcast %129 : vector<8x1xf32> to vector<8x64xf32>
    %131 = arith.mulf %119, %130 : vector<8x64xf32>
    %132 = vector.broadcast %121 : vector<1x64xf32> to vector<8x64xf32>
    %133 = arith.mulf %131, %132 : vector<8x64xf32>
    %c1_68 = arith.constant 1 : index
    %c0_69 = arith.constant 0 : index
    %c0_70 = arith.constant 0 : index
    %134 = vector.load %arg8[%c1_68, %c0_69, %c0_70] : memref<2x64x64xbf16, #tpu.memory_space<vmem>>, vector<1x64x64xbf16>
    %135 = vector.shape_cast %134 : vector<1x64x64xbf16> to vector<64x64xbf16>
    %c1_71 = arith.constant 1 : index
    %c0_72 = arith.constant 0 : index
    %c0_73 = arith.constant 0 : index
    %136 = vector.load %arg9[%c1_71, %c0_72, %c0_73] : memref<2x1x64xf32, #tpu.memory_space<vmem>>, vector<1x1x64xf32>
    %137 = vector.shape_cast %136 : vector<1x1x64xf32> to vector<1x64xf32>
    %138 = arith.truncf %133 : vector<8x64xf32> to vector<8x64xbf16>
    %cst_74 = arith.constant dense<0.000000e+00> : vector<8x64xf32>
    %139 = tpu.matmul %138, %135, %cst_74 {dimension_numbers = #tpu.dot_dimension_numbers<[1], [0], [0], [1], [0, 0, 1, 1], [], []>} : vector<8x64xbf16>, vector<64x64xbf16>, vector<8x64xf32> -> vector<8x64xf32>
    %140 = vector.broadcast %137 : vector<1x64xf32> to vector<8x64xf32>
    %141 = arith.addf %139, %140 : vector<8x64xf32>
    %c1_75 = arith.constant 1 : index
    %c0_76 = arith.constant 0 : index
    %c0_77 = arith.constant 0 : index
    %142 = vector.load %arg10[%c1_75, %c0_76, %c0_77] : memref<2x64x64xbf16, #tpu.memory_space<vmem>>, vector<1x64x64xbf16>
    %143 = vector.shape_cast %142 : vector<1x64x64xbf16> to vector<64x64xbf16>
    %c1_78 = arith.constant 1 : index
    %c0_79 = arith.constant 0 : index
    %c0_80 = arith.constant 0 : index
    %144 = vector.load %arg11[%c1_78, %c0_79, %c0_80] : memref<2x1x64xf32, #tpu.memory_space<vmem>>, vector<1x1x64xf32>
    %145 = vector.shape_cast %144 : vector<1x1x64xf32> to vector<1x64xf32>
    %146 = arith.truncf %133 : vector<8x64xf32> to vector<8x64xbf16>
    %cst_81 = arith.constant dense<0.000000e+00> : vector<8x64xf32>
    %147 = tpu.matmul %146, %143, %cst_81 {dimension_numbers = #tpu.dot_dimension_numbers<[1], [0], [0], [1], [0, 0, 1, 1], [], []>} : vector<8x64xbf16>, vector<64x64xbf16>, vector<8x64xf32> -> vector<8x64xf32>
    %148 = vector.broadcast %145 : vector<1x64xf32> to vector<8x64xf32>
    %149 = arith.addf %147, %148 : vector<8x64xf32>
    %c1_82 = arith.constant 1 : index
    %c0_83 = arith.constant 0 : index
    %c0_84 = arith.constant 0 : index
    %150 = vector.load %arg12[%c1_82, %c0_83, %c0_84] : memref<2x64x64xbf16, #tpu.memory_space<vmem>>, vector<1x64x64xbf16>
    %151 = vector.shape_cast %150 : vector<1x64x64xbf16> to vector<64x64xbf16>
    %c1_85 = arith.constant 1 : index
    %c0_86 = arith.constant 0 : index
    %c0_87 = arith.constant 0 : index
    %152 = vector.load %arg13[%c1_85, %c0_86, %c0_87] : memref<2x1x64xf32, #tpu.memory_space<vmem>>, vector<1x1x64xf32>
    %153 = vector.shape_cast %152 : vector<1x1x64xf32> to vector<1x64xf32>
    %154 = arith.truncf %133 : vector<8x64xf32> to vector<8x64xbf16>
    %cst_88 = arith.constant dense<0.000000e+00> : vector<8x64xf32>
    %155 = tpu.matmul %154, %151, %cst_88 {dimension_numbers = #tpu.dot_dimension_numbers<[1], [0], [0], [1], [0, 0, 1, 1], [], []>} : vector<8x64xbf16>, vector<64x64xbf16>, vector<8x64xf32> -> vector<8x64xf32>
    %156 = vector.broadcast %153 : vector<1x64xf32> to vector<8x64xf32>
    %157 = arith.addf %155, %156 : vector<8x64xf32>
    %158 = arith.mulf %141, %0 : vector<8x64xf32>
    %159 = arith.truncf %141 : vector<8x64xf32> to vector<8x64xbf16>
    %cst_89 = arith.constant dense<0.000000e+00> : vector<8x64xf32>
    %160 = tpu.matmul %159, %2, %cst_89 {dimension_numbers = #tpu.dot_dimension_numbers<[1], [0], [0], [1], [0, 0, 1, 1], [], []>} : vector<8x64xbf16>, vector<64x64xbf16>, vector<8x64xf32> -> vector<8x64xf32>
    %161 = arith.mulf %160, %1 : vector<8x64xf32>
    %162 = arith.addf %158, %161 : vector<8x64xf32>
    %163 = arith.mulf %149, %0 : vector<8x64xf32>
    %164 = arith.truncf %149 : vector<8x64xf32> to vector<8x64xbf16>
    %cst_90 = arith.constant dense<0.000000e+00> : vector<8x64xf32>
    %165 = tpu.matmul %164, %2, %cst_90 {dimension_numbers = #tpu.dot_dimension_numbers<[1], [0], [0], [1], [0, 0, 1, 1], [], []>} : vector<8x64xbf16>, vector<64x64xbf16>, vector<8x64xf32> -> vector<8x64xf32>
    %166 = arith.mulf %165, %1 : vector<8x64xf32>
    %167 = arith.addf %163, %166 : vector<8x64xf32>
    %168 = tpu.concatenate %162, %162, %162, %162 in 0 : vector<8x64xf32>, vector<8x64xf32>, vector<8x64xf32>, vector<8x64xf32> -> vector<32x64xf32>
    %169 = arith.mulf %168, %3 : vector<32x64xf32>
    %170 = arith.truncf %169 : vector<32x64xf32> to vector<32x64xbf16>
    %171 = arith.truncf %167 : vector<8x64xf32> to vector<8x64xbf16>
    %cst_91 = arith.constant dense<0.000000e+00> : vector<32x8xf32>
    %172 = tpu.matmul %170, %171, %cst_91 {dimension_numbers = #tpu.dot_dimension_numbers<[1], [1], [0], [0], [0, 0, 1, 0], [], []>} : vector<32x64xbf16>, vector<8x64xbf16>, vector<32x8xf32> -> vector<32x8xf32>
    %173 = arith.addf %172, %4 : vector<32x8xf32>
    %cst_92 = arith.constant dense<0xFF800000> : vector<32xf32>
    %174 = vector.multi_reduction <maximumf>, %173, %cst_92 [1] : vector<32x8xf32> to vector<32xf32>
    %175 = vector.shape_cast %174 : vector<32xf32> to vector<32x1xf32>
    %176 = vector.broadcast %175 : vector<32x1xf32> to vector<32x8xf32>
    %177 = arith.subf %173, %176 : vector<32x8xf32>
    %178 = math.exp %177 : vector<32x8xf32>
    %cst_93 = arith.constant dense<0.000000e+00> : vector<32xf32>
    %179 = vector.multi_reduction <add>, %178, %cst_93 [1] : vector<32x8xf32> to vector<32xf32>
    %180 = vector.shape_cast %179 : vector<32xf32> to vector<32x1xf32>
    %181 = tpu.reciprocal %180 {approx = true} : vector<32x1xf32> -> vector<32x1xf32>
    %182 = vector.broadcast %181 : vector<32x1xf32> to vector<32x8xf32>
    %183 = arith.mulf %178, %182 : vector<32x8xf32>
    %184 = arith.truncf %183 : vector<32x8xf32> to vector<32x8xbf16>
    %185 = arith.truncf %157 : vector<8x64xf32> to vector<8x64xbf16>
    %cst_94 = arith.constant dense<0.000000e+00> : vector<32x64xf32>
    %186 = tpu.matmul %184, %185, %cst_94 {dimension_numbers = #tpu.dot_dimension_numbers<[1], [0], [0], [1], [0, 0, 1, 1], [], []>} : vector<32x8xbf16>, vector<8x64xbf16>, vector<32x64xf32> -> vector<32x64xf32>
    %187 = arith.mulf %186, %3 : vector<32x64xf32>
    %188 = vector.extract_strided_slice %187 {offsets = [0, 0], sizes = [8, 64], strides = [1, 1]} : vector<32x64xf32> to vector<8x64xf32>
    %189 = vector.extract_strided_slice %187 {offsets = [8, 0], sizes = [8, 64], strides = [1, 1]} : vector<32x64xf32> to vector<8x64xf32>
    %190 = arith.addf %188, %189 : vector<8x64xf32>
    %191 = vector.extract_strided_slice %187 {offsets = [16, 0], sizes = [8, 64], strides = [1, 1]} : vector<32x64xf32> to vector<8x64xf32>
    %192 = arith.addf %190, %191 : vector<8x64xf32>
    %193 = vector.extract_strided_slice %187 {offsets = [24, 0], sizes = [8, 64], strides = [1, 1]} : vector<32x64xf32> to vector<8x64xf32>
    %194 = arith.addf %192, %193 : vector<8x64xf32>
    %c1_95 = arith.constant 1 : index
    %c0_96 = arith.constant 0 : index
    %c0_97 = arith.constant 0 : index
    %195 = vector.load %arg14[%c1_95, %c0_96, %c0_97] : memref<2x64x64xbf16, #tpu.memory_space<vmem>>, vector<1x64x64xbf16>
    %196 = vector.shape_cast %195 : vector<1x64x64xbf16> to vector<64x64xbf16>
    %197 = arith.truncf %194 : vector<8x64xf32> to vector<8x64xbf16>
    %cst_98 = arith.constant dense<0.000000e+00> : vector<8x64xf32>
    %198 = tpu.matmul %197, %196, %cst_98 {dimension_numbers = #tpu.dot_dimension_numbers<[1], [0], [0], [1], [0, 0, 1, 1], [], []>} : vector<8x64xbf16>, vector<64x64xbf16>, vector<8x64xf32> -> vector<8x64xf32>
    %199 = arith.addf %198, %119 : vector<8x64xf32>
    %c1_99 = arith.constant 1 : index
    %c0_100 = arith.constant 0 : index
    %c0_101 = arith.constant 0 : index
    %200 = vector.load %arg7[%c1_99, %c0_100, %c0_101] : memref<2x1x64xf32, #tpu.memory_space<vmem>>, vector<1x1x64xf32>
    %201 = vector.shape_cast %200 : vector<1x1x64xf32> to vector<1x64xf32>
    %202 = arith.mulf %199, %199 : vector<8x64xf32>
    %cst_102 = arith.constant dense<0.000000e+00> : vector<8xf32>
    %203 = vector.multi_reduction <add>, %202, %cst_102 [1] : vector<8x64xf32> to vector<8xf32>
    %204 = vector.shape_cast %203 : vector<8xf32> to vector<8x1xf32>
    %cst_103 = arith.constant 6.400000e+01 : f32
    %205 = vector.broadcast %cst_103 : f32 to vector<8x1xf32>
    %206 = arith.divf %204, %205 : vector<8x1xf32>
    %cst_104 = arith.constant 9.99999997E-7 : f32
    %207 = vector.broadcast %cst_104 : f32 to vector<8x1xf32>
    %208 = arith.addf %206, %207 : vector<8x1xf32>
    %209 = math.rsqrt %208 : vector<8x1xf32>
    %210 = vector.broadcast %209 : vector<8x1xf32> to vector<8x64xf32>
    %211 = arith.mulf %199, %210 : vector<8x64xf32>
    %212 = vector.broadcast %201 : vector<1x64xf32> to vector<8x64xf32>
    %213 = arith.mulf %211, %212 : vector<8x64xf32>
    %c1_105 = arith.constant 1 : index
    %c0_106 = arith.constant 0 : index
    %c0_107 = arith.constant 0 : index
    %214 = vector.load %arg15[%c1_105, %c0_106, %c0_107] : memref<2x64x256xbf16, #tpu.memory_space<vmem>>, vector<1x64x256xbf16>
    %215 = vector.shape_cast %214 : vector<1x64x256xbf16> to vector<64x256xbf16>
    %216 = arith.truncf %213 : vector<8x64xf32> to vector<8x64xbf16>
    %cst_108 = arith.constant dense<0.000000e+00> : vector<8x256xf32>
    %217 = tpu.matmul %216, %215, %cst_108 {dimension_numbers = #tpu.dot_dimension_numbers<[1], [0], [0], [1], [0, 0, 1, 1], [], []>} : vector<8x64xbf16>, vector<64x256xbf16>, vector<8x256xf32> -> vector<8x256xf32>
    %218 = vector.extract_strided_slice %217 {offsets = [0, 0], sizes = [8, 128], strides = [1, 1]} : vector<8x256xf32> to vector<8x128xf32>
    %219 = vector.extract_strided_slice %217 {offsets = [0, 128], sizes = [8, 128], strides = [1, 1]} : vector<8x256xf32> to vector<8x128xf32>
    %220 = arith.negf %218 : vector<8x128xf32>
    %221 = math.exp %220 : vector<8x128xf32>
    %cst_109 = arith.constant 1.000000e+00 : f32
    %222 = vector.broadcast %cst_109 : f32 to vector<8x128xf32>
    %223 = arith.addf %222, %221 : vector<8x128xf32>
    %224 = arith.divf %222, %223 : vector<8x128xf32>
    %225 = arith.mulf %218, %224 : vector<8x128xf32>
    %226 = arith.mulf %225, %219 : vector<8x128xf32>
    %c1_110 = arith.constant 1 : index
    %c0_111 = arith.constant 0 : index
    %c0_112 = arith.constant 0 : index
    %227 = vector.load %arg16[%c1_110, %c0_111, %c0_112] : memref<2x128x64xbf16, #tpu.memory_space<vmem>>, vector<1x128x64xbf16>
    %228 = vector.shape_cast %227 : vector<1x128x64xbf16> to vector<128x64xbf16>
    %229 = arith.truncf %226 : vector<8x128xf32> to vector<8x128xbf16>
    %cst_113 = arith.constant dense<0.000000e+00> : vector<8x64xf32>
    %230 = tpu.matmul %229, %228, %cst_113 {dimension_numbers = #tpu.dot_dimension_numbers<[1], [0], [0], [1], [0, 0, 1, 1], [], []>} : vector<8x128xbf16>, vector<128x64xbf16>, vector<8x64xf32> -> vector<8x64xf32>
    %231 = arith.addf %230, %199 : vector<8x64xf32>
    %c0_114 = arith.constant 0 : index
    %c0_115 = arith.constant 0 : index
    %232 = vector.load %arg17[%c0_114, %c0_115] : memref<1x64xf32, #tpu.memory_space<vmem>>, vector<1x64xf32>
    %233 = arith.mulf %231, %231 : vector<8x64xf32>
    %cst_116 = arith.constant dense<0.000000e+00> : vector<8xf32>
    %234 = vector.multi_reduction <add>, %233, %cst_116 [1] : vector<8x64xf32> to vector<8xf32>
    %235 = vector.shape_cast %234 : vector<8xf32> to vector<8x1xf32>
    %cst_117 = arith.constant 6.400000e+01 : f32
    %236 = vector.broadcast %cst_117 : f32 to vector<8x1xf32>
    %237 = arith.divf %235, %236 : vector<8x1xf32>
    %cst_118 = arith.constant 9.99999997E-7 : f32
    %238 = vector.broadcast %cst_118 : f32 to vector<8x1xf32>
    %239 = arith.addf %237, %238 : vector<8x1xf32>
    %240 = math.rsqrt %239 : vector<8x1xf32>
    %241 = vector.broadcast %240 : vector<8x1xf32> to vector<8x64xf32>
    %242 = arith.mulf %231, %241 : vector<8x64xf32>
    %243 = vector.broadcast %232 : vector<1x64xf32> to vector<8x64xf32>
    %244 = arith.mulf %242, %243 : vector<8x64xf32>
    %c0_119 = arith.constant 0 : index
    %c0_120 = arith.constant 0 : index
    %245 = vector.load %arg18[%c0_119, %c0_120] : memref<8x64xf32, #tpu.memory_space<vmem>>, vector<8x64xf32>
    tpu.vector_store %arg18[%c0_119, %c0_120], %244 {strides = array<i32>} : memref<8x64xf32, #tpu.memory_space<vmem>>, vector<8x64xf32>,
    return
  }
}

</mosaic_0001>

<llo_original>
// kernel: tile.14
$region0: #{tile.14}
  %s0 = inlined_call_operand.vmem [shape: f32[8,4,16], index: 0, kind: input, shape index: {}]
  %s1 = inlined_call_operand.vmem [shape: f32[8,64], index: 1, kind: output, shape index: {}]
  $region1: #{tile.14} parent=0
    #allocation0 [shape = 'u8[32768]{0}', space=vmem, size = 0x8000, scoped, tag = 'scoped mem for input reshape']
    %s3 = sshllo.u32 0, 4
    %s4 = smul.addr 4, 7
    %s5 = scalar_lea.vmem %s0, %s4
    %v6 = vld [vmem:[%s5] sm:%s3]
    %s7 = scalar_lea.vmem [#allocation0], 56
    %8 = vst [vmem:[%s7] sm:%s3] %v6
    %s9 = smul.addr 4, 6
    %s10 = scalar_lea.vmem %s0, %s9
    %v11 = vld [vmem:[%s10] sm:%s3]
    %s12 = scalar_lea.vmem [#allocation0], 48
    %13 = vst [vmem:[%s12] sm:%s3] %v11
    %s14 = smul.addr 4, 5
    %s15 = scalar_lea.vmem %s0, %s14
    %v16 = vld [vmem:[%s15] sm:%s3]
    %s17 = scalar_lea.vmem [#allocation0], 40
    %18 = vst [vmem:[%s17] sm:%s3] %v16
    %s19 = smul.addr 4, 4
    %s20 = scalar_lea.vmem %s0, %s19
    %v21 = vld [vmem:[%s20] sm:%s3]
    %s22 = scalar_lea.vmem [#allocation0], 32
    %23 = vst [vmem:[%s22] sm:%s3] %v21
    %s24 = smul.addr 4, 3
    %s25 = scalar_lea.vmem %s0, %s24
    %v26 = vld [vmem:[%s25] sm:%s3]
    %s27 = scalar_lea.vmem [#allocation0], 24
    %28 = vst [vmem:[%s27] sm:%s3] %v26
    %s29 = smul.addr 4, 2
    %s30 = scalar_lea.vmem %s0, %s29
    %v31 = vld [vmem:[%s30] sm:%s3]
    %s32 = scalar_lea.vmem [#allocation0], 16
    %33 = vst [vmem:[%s32] sm:%s3] %v31
    %s34 = scalar_lea.vmem %s0, 4
    %v35 = vld [vmem:[%s34] sm:%s3]
    %s36 = scalar_lea.vmem [#allocation0], 8
    %37 = vst [vmem:[%s36] sm:%s3] %v35
    %v38 = vld [vmem:[%s0] sm:%s3]
    %39 = vst [vmem:[#allocation0] sm:%s3] %v38
    %v40 = vld [vmem:[#allocation0] ss:$8 sm:$0xf]
    %v41 = vld [vmem:[#allocation0] ss:$8 sm:$0xf0]
    %vm42 = vcmask 1047556
    %v43 = vsel %vm42, %v41, %v40
    %vm44 = vcmask 130048
    %45 = vst.msk [vmem:[%s1] sm:$0xff] %vm44, %v43
    %s46 = scalar_lea.vmem [#allocation0], 3
    %v47 = vld [vmem:[%s46] ss:$8 sm:$0xf]
    %s48 = scalar_lea.vmem [#allocation0], 3
    %v49 = vld [vmem:[%s48] ss:$8 sm:$0xf0]
    %vm50 = vcmask 1047556
    %v51 = vsel %vm50, %v49, %v47
    %52 = vrot.lane.b32.xlu0 %v51, 48
    %v53 = vpop.permute.xlu0 %52
    %vm54 = vcmask 523648
    %55 = vst.msk [vmem:[%s1] sm:$0xff] %vm54, %v53
    %s56 = scalar_lea.vmem [#allocation0], 2
    %v57 = vld [vmem:[%s56] ss:$8 sm:$0xf]
    %s58 = scalar_lea.vmem [#allocation0], 2
    %v59 = vld [vmem:[%s58] ss:$8 sm:$0xf0]
    %vm60 = vcmask 1047556
    %v61 = vsel %vm60, %v59, %v57
    %62 = vrot.lane.b32.xlu0 %v61, 32
    %v63 = vpop.permute.xlu0 %62
    %vm64 = vcmask 392448
    %65 = vst.msk [vmem:[%s1] sm:$0xff] %vm64, %v63
    %s66 = scalar_lea.vmem [#allocation0], 1
    %v67 = vld [vmem:[%s66] ss:$8 sm:$0xf]
    %s68 = scalar_lea.vmem [#allocation0], 1
    %v69 = vld [vmem:[%s68] ss:$8 sm:$0xf0]
    %vm70 = vcmask 1047556
    %v71 = vsel %vm70, %v69, %v67
    %72 = vrot.lane.b32.xlu0 %v71, 16
    %v73 = vpop.permute.xlu0 %72
    %vm74 = vcmask 261248
    %75 = vst.msk [vmem:[%s1] sm:$0xff] %vm74, %v73

// kernel: _lambda_.1
$region0: #{_lambda_.1}
  #allocation0 [shape = 'u32[]', space=smem, size = 0x4, offset = 0x4, fixed_abs, tag = 'smem constant byte address 0x4 - core index']
  #allocation1 [shape = 'u32[144,128]{1,0:T(1,128)}', space=vmem, size = 0x12000, scoped, tag = 'internal scratch']
  %s0 = inlined_call_operand.vmem [shape: f32[8,64], index: 0, kind: input, shape index: {}]
  %s1 = inlined_call_operand.vmem [shape: f32[8,64], index: 1, kind: input, shape index: {}]
  %s2 = inlined_call_operand.vmem [shape: f32[8,64], index: 2, kind: input, shape index: {}]
  %s3 = inlined_call_operand.vmem [shape: bf16[64,64], index: 3, kind: input, shape index: {}]
  %s4 = inlined_call_operand.vmem [shape: f32[32,64], index: 4, kind: input, shape index: {}]
  %s5 = inlined_call_operand.vmem [shape: f32[32,8], index: 5, kind: input, shape index: {}]
  %s6 = inlined_call_operand.vmem [shape: f32[2,1,64], index: 6, kind: input, shape index: {}]
  %s7 = inlined_call_operand.vmem [shape: f32[2,1,64], index: 7, kind: input, shape index: {}]
  %s8 = inlined_call_operand.vmem [shape: bf16[2,64,64], index: 8, kind: input, shape index: {}]
  %s9 = inlined_call_operand.vmem [shape: f32[2,1,64], index: 9, kind: input, shape index: {}]
  %s10 = inlined_call_operand.vmem [shape: bf16[2,64,64], index: 10, kind: input, shape index: {}]
  %s11 = inlined_call_operand.vmem [shape: f32[2,1,64], index: 11, kind: input, shape index: {}]
  %s12 = inlined_call_operand.vmem [shape: bf16[2,64,64], index: 12, kind: input, shape index: {}]
  %s13 = inlined_call_operand.vmem [shape: f32[2,1,64], index: 13, kind: input, shape index: {}]
  %s14 = inlined_call_operand.vmem [shape: bf16[2,64,64], index: 14, kind: input, shape index: {}]
  %s15 = inlined_call_operand.vmem [shape: bf16[2,64,256], index: 15, kind: input, shape index: {}]
  %s16 = inlined_call_operand.vmem [shape: bf16[2,128,64], index: 16, kind: input, shape index: {}]
  %s17 = inlined_call_operand.vmem [shape: f32[1,64], index: 17, kind: input, shape index: {}]
  %s18 = inlined_call_operand.hbm [shape: f32[8,64], index: 18, kind: output, shape index: {}]
  %s19 = sld [smem:[#allocation0]]
  $region82: #{_lambda_.1} parent=0
    _
  %s21 = ssub.s32 1, %s19
  %s22 = scalar_select 0, %s21, %s19
  $region1: #{_lambda_.1} parent=0
    #allocation2 [shape = 'u8[4096]{0}', space=vmem, size = 0x1000, scoped, tag = 'output window, operand 0, single buffered']
    #allocation3 [shape = 's32[1]{0}', space=sflag, size = 0x4, scoped, tag = 'scoped memory for _lambda_.1']
    %23 = vsyncpa [#allocation3], 0
    // Predicated region
    $region2: #{_lambda_.1} parent=1 // pred_check
      _
    $region3: #{_lambda_.1} parent=1 // pred_check_branch
      %25 = sbr.rel (0) target = $region5
    $region4: #{_lambda_.1} parent=1 // pred_region
      _
    $region5: #{_lambda_.1} parent=1 // pred_fallthru
      _
    // Predicated region
    $region6: #{_lambda_.1} parent=1 // pred_check
      _
    $region7: #{_lambda_.1} parent=1 // pred_check_branch
      %27 = sbr.rel (0) target = $region9
    $region8: #{_lambda_.1} parent=1 // pred_region
      _
    $region9: #{_lambda_.1} parent=1 // pred_fallthru
      _
    // Predicated region
    $region10: #{_lambda_.1} parent=1 // pred_check
      _
    $region11: #{_lambda_.1} parent=1 // pred_check_branch
      %29 = sbr.rel (0) target = $region13
    $region12: #{_lambda_.1} parent=1 // pred_region
      _
    $region13: #{_lambda_.1} parent=1 // pred_fallthru
      _
    // Predicated region
    $region14: #{_lambda_.1} parent=1 // pred_check
      _
    $region15: #{_lambda_.1} parent=1 // pred_check_branch
      %31 = sbr.rel (0) target = $region17
    $region16: #{_lambda_.1} parent=1 // pred_region
      _
    $region17: #{_lambda_.1} parent=1 // pred_fallthru
      _
    // Predicated region
    $region18: #{_lambda_.1} parent=1 // pred_check
      _
    $region19: #{_lambda_.1} parent=1 // pred_check_branch
      %33 = sbr.rel (0) target = $region21
    $region20: #{_lambda_.1} parent=1 // pred_region
      _
    $region21: #{_lambda_.1} parent=1 // pred_fallthru
      _
    // Predicated region
    $region22: #{_lambda_.1} parent=1 // pred_check
      _
    $region23: #{_lambda_.1} parent=1 // pred_check_branch
      %35 = sbr.rel (0) target = $region25
    $region24: #{_lambda_.1} parent=1 // pred_region
      _
    $region25: #{_lambda_.1} parent=1 // pred_fallthru
      _
    // Predicated region
    $region26: #{_lambda_.1} parent=1 // pred_check
      _
    $region27: #{_lambda_.1} parent=1 // pred_check_branch
      %37 = sbr.rel (0) target = $region29
    $region28: #{_lambda_.1} parent=1 // pred_region
      _
    $region29: #{_lambda_.1} parent=1 // pred_fallthru
      _
    // Predicated region
    $region30: #{_lambda_.1} parent=1 // pred_check
      _
    $region31: #{_lambda_.1} parent=1 // pred_check_branch
      %39 = sbr.rel (0) target = $region33
    $region32: #{_lambda_.1} parent=1 // pred_region
      _
    $region33: #{_lambda_.1} parent=1 // pred_fallthru
      _
    // Predicated region
    $region34: #{_lambda_.1} parent=1 // pred_check
      _
    $region35: #{_lambda_.1} parent=1 // pred_check_branch
      %41 = sbr.rel (0) target = $region37
    $region36: #{_lambda_.1} parent=1 // pred_region
      _
    $region37: #{_lambda_.1} parent=1 // pred_fallthru
      _
    // Predicated region
    $region38: #{_lambda_.1} parent=1 // pred_check
      _
    $region39: #{_lambda_.1} parent=1 // pred_check_branch
      %43 = sbr.rel (0) target = $region41
    $region40: #{_lambda_.1} parent=1 // pred_region
      _
    $region41: #{_lambda_.1} parent=1 // pred_fallthru
      _
    // Predicated region
    $region42: #{_lambda_.1} parent=1 // pred_check
      _
    $region43: #{_lambda_.1} parent=1 // pred_check_branch
      %45 = sbr.rel (0) target = $region45
    $region44: #{_lambda_.1} parent=1 // pred_region
      _
    $region45: #{_lambda_.1} parent=1 // pred_fallthru
      _
    // Predicated region
    $region46: #{_lambda_.1} parent=1 // pred_check
      _
    $region47: #{_lambda_.1} parent=1 // pred_check_branch
      %47 = sbr.rel (0) target = $region49
    $region48: #{_lambda_.1} parent=1 // pred_region
      _
    $region49: #{_lambda_.1} parent=1 // pred_fallthru
      _
    // Predicated region
    $region50: #{_lambda_.1} parent=1 // pred_check
      _
    $region51: #{_lambda_.1} parent=1 // pred_check_branch
      %49 = sbr.rel (0) target = $region53
    $region52: #{_lambda_.1} parent=1 // pred_region
      _
    $region53: #{_lambda_.1} parent=1 // pred_fallthru
      _
    // Predicated region
    $region54: #{_lambda_.1} parent=1 // pred_check
      _
    $region55: #{_lambda_.1} parent=1 // pred_check_branch
      %51 = sbr.rel (0) target = $region57
    $region56: #{_lambda_.1} parent=1 // pred_region
      _
    $region57: #{_lambda_.1} parent=1 // pred_fallthru
      _
    // Predicated region
    $region58: #{_lambda_.1} parent=1 // pred_check
      _
    $region59: #{_lambda_.1} parent=1 // pred_check_branch
      %53 = sbr.rel (0) target = $region61
    $region60: #{_lambda_.1} parent=1 // pred_region
      _
    $region61: #{_lambda_.1} parent=1 // pred_fallthru
      _
    // Predicated region
    $region62: #{_lambda_.1} parent=1 // pred_check
      _
    $region63: #{_lambda_.1} parent=1 // pred_check_branch
      %55 = sbr.rel (0) target = $region65
    $region64: #{_lambda_.1} parent=1 // pred_region
      _
    $region65: #{_lambda_.1} parent=1 // pred_fallthru
      _
    // Predicated region
    $region66: #{_lambda_.1} parent=1 // pred_check
      _
    $region67: #{_lambda_.1} parent=1 // pred_check_branch
      %57 = sbr.rel (0) target = $region69
    $region68: #{_lambda_.1} parent=1 // pred_region
      _
    $region69: #{_lambda_.1} parent=1 // pred_fallthru
      _
    // Predicated region
    $region70: #{_lambda_.1} parent=1 // pred_check
      _
    $region71: #{_lambda_.1} parent=1 // pred_check_branch
      %59 = sbr.rel (0) target = $region73
    $region72: #{_lambda_.1} parent=1 // pred_region
      _
    $region73: #{_lambda_.1} parent=1 // pred_fallthru
      _
    %v61 = vld [vmem:[%s1] sm:$0xff]
    %v62 = vld [vmem:[%s2] sm:$0xff]
    %v63 = vld [vmem:[%s3] sm:$0xf]
    %v64 = vld [vmem:[%s3 + $0x4] sm:$0xf]
    %v65 = vld [vmem:[%s3 + $0x8] sm:$0xf]
    %v66 = vld [vmem:[%s3 + $0xc] sm:$0xf]
    %v67 = vld [vmem:[%s3 + $0x10] sm:$0xf]
    %v68 = vld [vmem:[%s3 + $0x14] sm:$0xf]
    %v69 = vld [vmem:[%s3 + $0x18] sm:$0xf]
    %v70 = vld [vmem:[%s3 + $0x1c] sm:$0xf]
    %v71 = vld [vmem:[%s4] sm:$0xff]
    %v72 = vld [vmem:[%s4 + $0x8] sm:$0xff]
    %v73 = vld [vmem:[%s4 + $0x10] sm:$0xff]
    %v74 = vld [vmem:[%s4 + $0x18] sm:$0xff]
    %v75 = vld [vmem:[%s5] sm:$0xff]
    %v76 = vld [vmem:[%s5 + $0x8] sm:$0xff]
    %v77 = vld [vmem:[%s5 + $0x10] sm:$0xff]
    %v78 = vld [vmem:[%s5 + $0x18] sm:$0xff]
    %v79 = vld [vmem:[%s0] sm:$0xff]
    %v80 = vadd.f32 %v79, 0.0
    %v81 = vld [vmem:[%s6] sm:$0x1]
    %v82 = vmul.f32 %v80, %v80
    %vm83 = vcmask 523264
    %v84 = vsel %vm83, %v82, 0.0
    %85 = vadd.xlane.f32.xlu0 %v84
    %v86 = vpop.xlane.xlu0 %85
    %v87 = vrcp.pop 64.0
    %v88 = vmul.f32 %v86, %v87
    %v89 = vadd.f32 %v88, 1e-06
    %v90 = vrsqrt.pop %v89
    %v91 = vmul.f32 %v80, %v90
    %v93 = vlaneseq
    %v94 = vshrl.u32 %v93, 7
    %v95 = vsub.s32 0, %v94
    %v96 = vrot.slane %v81, %v95
    %v98 = vmul.f32 %v91, %v96
    %v99 = vld [vmem:[%s8] sm:$0xf]
    %v100 = vld [vmem:[%s8 + $0x4] sm:$0xf]
    %v101 = vld [vmem:[%s8 + $0x8] sm:$0xf]
    %v102 = vld [vmem:[%s8 + $0xc] sm:$0xf]
    %v103 = vld [vmem:[%s8 + $0x10] sm:$0xf]
    %v104 = vld [vmem:[%s8 + $0x14] sm:$0xf]
    %v105 = vld [vmem:[%s8 + $0x18] sm:$0xf]
    %v106 = vld [vmem:[%s8 + $0x1c] sm:$0xf]
    %v107 = vld [vmem:[%s9] sm:$0x1]
    %v108 = vpack.c.bf16 %v98, %v98
    %v110 = vlaneseq
    %v111 = vshrl.u32 %v110, 7
    %v112 = vsub.s32 0, %v111
    %v113 = vrot.slane %v107, %v112
    %v123 = vunpack.c.l.b16 %v99
    %v124 = vunpack.c.l.b16 %v100
    %v125 = vunpack.c.l.b16 %v101
    %v126 = vunpack.c.l.b16 %v102
    %v127 = vunpack.c.l.b16 %v103
    %v128 = vunpack.c.l.b16 %v104
    %v129 = vunpack.c.l.b16 %v105
    %v130 = vunpack.c.l.b16 %v106
    %v131 = vpack.c.b16 %v124, %v123
    %v132 = vpack.c.b16 %v126, %v125
    %v133 = vpack.c.b16 %v128, %v127
    %v134 = vpack.c.b16 %v130, %v129
    %v140 = vsel %vm83, %v108, 0
    %142 = vmatprep.subr.bf16.mxu0 0
    %143 = vmatpush1.bf16.msra.mxu0 %v131
    %144 = vmatprep.subr.bf16.mxu0 0
    %145 = vmatpush1.bf16.msra.mxu0 %v132
    %146 = vmatprep.subr.bf16.mxu0 0
    %147 = vmatpush1.bf16.msra.mxu0 %v133
    %148 = vmatprep.subr.bf16.mxu0 0
    %149 = vmatpush1.bf16.msra.mxu0 %v134
    %150 = vmatprep.subr.bf16.mxu0 0
    %151 = vmatpush1.bf16.msra.mxu0 0
    %152 = vmatprep.subr.bf16.mxu0 0
    %153 = vmatpush1.bf16.msra.mxu0 0
    %154 = vmatprep.subr.bf16.mxu0 0
    %155 = vmatpush1.bf16.msra.mxu0 0
    %156 = vmatprep.subr.bf16.mxu0 0
    %157 = vmatpush1.bf16.msra.mxu0 0
    %158 = vmatprep.subr.bf16.mxu0 0
    %159 = vmatpush1.bf16.msra.mxu0 0
    %160 = vmatprep.subr.bf16.mxu0 0
    %161 = vmatpush1.bf16.msra.mxu0 0
    %162 = vmatprep.subr.bf16.mxu0 0
    %163 = vmatpush1.bf16.msra.mxu0 0
    %164 = vmatprep.subr.bf16.mxu0 0
    %165 = vmatpush1.bf16.msra.mxu0 0
    %166 = vmatprep.subr.bf16.mxu0 0
    %167 = vmatpush1.bf16.msra.mxu0 0
    %168 = vmatprep.subr.bf16.mxu0 0
    %169 = vmatpush1.bf16.msra.mxu0 0
    %170 = vmatprep.subr.bf16.mxu0 0
    %171 = vmatpush1.bf16.msra.mxu0 0
    %172 = vmatprep.subr.bf16.mxu0 0
    %173 = vmatpush1.bf16.msra.mxu0 0
    %174 = vmatprep.mubr.bf16.mxu0 0
    %175 = vmatmul.mubr.bf16.gmra.mrb[0].mxu0 %v140
    %v176 = vpop.f32.mrb[0].mxu0
    %v177 = vadd.f32 %v113, %v176
    %v178 = vpop.f32.mrb[0].mxu0
    %v179 = vpop.f32.mrb[0].mxu0
    %v180 = vpop.f32.mrb[0].mxu0
    %181 = vdwg.mxu0
    %v182 = vld [vmem:[%s10] sm:$0xf]
    %v183 = vld [vmem:[%s10 + $0x4] sm:$0xf]
    %v184 = vld [vmem:[%s10 + $0x8] sm:$0xf]
    %v185 = vld [vmem:[%s10 + $0xc] sm:$0xf]
    %v186 = vld [vmem:[%s10 + $0x10] sm:$0xf]
    %v187 = vld [vmem:[%s10 + $0x14] sm:$0xf]
    %v188 = vld [vmem:[%s10 + $0x18] sm:$0xf]
    %v189 = vld [vmem:[%s10 + $0x1c] sm:$0xf]
    %v190 = vld [vmem:[%s11] sm:$0x1]
    %v192 = vlaneseq
    %v193 = vshrl.u32 %v192, 7
    %v194 = vsub.s32 0, %v193
    %v195 = vrot.slane %v190, %v194
    %v205 = vunpack.c.l.b16 %v182
    %v206 = vunpack.c.l.b16 %v183
    %v207 = vunpack.c.l.b16 %v184
    %v208 = vunpack.c.l.b16 %v185
    %v209 = vunpack.c.l.b16 %v186
    %v210 = vunpack.c.l.b16 %v187
    %v211 = vunpack.c.l.b16 %v188
    %v212 = vunpack.c.l.b16 %v189
    %v213 = vpack.c.b16 %v206, %v205
    %v214 = vpack.c.b16 %v208, %v207
    %v215 = vpack.c.b16 %v210, %v209
    %v216 = vpack.c.b16 %v212, %v211
    %221 = vmatprep.subr.bf16.mxu0 0
    %222 = vmatpush1.bf16.msra.mxu0 %v213
    %223 = vmatprep.subr.bf16.mxu0 0
    %224 = vmatpush1.bf16.msra.mxu0 %v214
    %225 = vmatprep.subr.bf16.mxu0 0
    %226 = vmatpush1.bf16.msra.mxu0 %v215
    %227 = vmatprep.subr.bf16.mxu0 0
    %228 = vmatpush1.bf16.msra.mxu0 %v216
    %229 = vmatprep.subr.bf16.mxu0 0
    %230 = vmatpush1.bf16.msra.mxu0 0
    %231 = vmatprep.subr.bf16.mxu0 0
    %232 = vmatpush1.bf16.msra.mxu0 0
    %233 = vmatprep.subr.bf16.mxu0 0
    %234 = vmatpush1.bf16.msra.mxu0 0
    %235 = vmatprep.subr.bf16.mxu0 0
    %236 = vmatpush1.bf16.msra.mxu0 0
    %237 = vmatprep.subr.bf16.mxu0 0
    %238 = vmatpush1.bf16.msra.mxu0 0
    %239 = vmatprep.subr.bf16.mxu0 0
    %240 = vmatpush1.bf16.msra.mxu0 0
    %241 = vmatprep.subr.bf16.mxu0 0
    %242 = vmatpush1.bf16.msra.mxu0 0
    %243 = vmatprep.subr.bf16.mxu0 0
    %244 = vmatpush1.bf16.msra.mxu0 0
    %245 = vmatprep.subr.bf16.mxu0 0
    %246 = vmatpush1.bf16.msra.mxu0 0
    %247 = vmatprep.subr.bf16.mxu0 0
    %248 = vmatpush1.bf16.msra.mxu0 0
    %249 = vmatprep.subr.bf16.mxu0 0
    %250 = vmatpush1.bf16.msra.mxu0 0
    %251 = vmatprep.subr.bf16.mxu0 0
    %252 = vmatpush1.bf16.msra.mxu0 0
    %253 = vmatprep.mubr.bf16.mxu0 0
    %254 = vmatmul.mubr.bf16.gmra.mrb[0].mxu0 %v140
    %v255 = vpop.f32.mrb[0].mxu0
    %v256 = vadd.f32 %v195, %v255
    %v257 = vpop.f32.mrb[0].mxu0
    %v258 = vpop.f32.mrb[0].mxu0
    %v259 = vpop.f32.mrb[0].mxu0
    %260 = vdwg.mxu0
    %v261 = vld [vmem:[%s12] sm:$0xf]
    %v262 = vld [vmem:[%s12 + $0x4] sm:$0xf]
    %v263 = vld [vmem:[%s12 + $0x8] sm:$0xf]
    %v264 = vld [vmem:[%s12 + $0xc] sm:$0xf]
    %v265 = vld [vmem:[%s12 + $0x10] sm:$0xf]
    %v266 = vld [vmem:[%s12 + $0x14] sm:$0xf]
    %v267 = vld [vmem:[%s12 + $0x18] sm:$0xf]
    %v268 = vld [vmem:[%s12 + $0x1c] sm:$0xf]
    %v269 = vld [vmem:[%s13] sm:$0x1]
    %v271 = vlaneseq
    %v272 = vshrl.u32 %v271, 7
    %v273 = vsub.s32 0, %v272
    %v274 = vrot.slane %v269, %v273
    %v284 = vunpack.c.l.b16 %v261
    %v285 = vunpack.c.l.b16 %v262
    %v286 = vunpack.c.l.b16 %v263
    %v287 = vunpack.c.l.b16 %v264
    %v288 = vunpack.c.l.b16 %v265
    %v289 = vunpack.c.l.b16 %v266
    %v290 = vunpack.c.l.b16 %v267
    %v291 = vunpack.c.l.b16 %v268
    %v292 = vpack.c.b16 %v285, %v284
    %v293 = vpack.c.b16 %v287, %v286
    %v294 = vpack.c.b16 %v289, %v288
    %v295 = vpack.c.b16 %v291, %v290
    %300 = vmatprep.subr.bf16.mxu0 0
    %301 = vmatpush1.bf16.msra.mxu0 %v292
    %302 = vmatprep.subr.bf16.mxu0 0
    %303 = vmatpush1.bf16.msra.mxu0 %v293
    %304 = vmatprep.subr.bf16.mxu0 0
    %305 = vmatpush1.bf16.msra.mxu0 %v294
    %306 = vmatprep.subr.bf16.mxu0 0
    %307 = vmatpush1.bf16.msra.mxu0 %v295
    %308 = vmatprep.subr.bf16.mxu0 0
    %309 = vmatpush1.bf16.msra.mxu0 0
    %310 = vmatprep.subr.bf16.mxu0 0
    %311 = vmatpush1.bf16.msra.mxu0 0
    %312 = vmatprep.subr.bf16.mxu0 0
    %313 = vmatpush1.bf16.msra.mxu0 0
    %314 = vmatprep.subr.bf16.mxu0 0
    %315 = vmatpush1.bf16.msra.mxu0 0
    %316 = vmatprep.subr.bf16.mxu0 0
    %317 = vmatpush1.bf16.msra.mxu0 0
    %318 = vmatprep.subr.bf16.mxu0 0
    %319 = vmatpush1.bf16.msra.mxu0 0
    %320 = vmatprep.subr.bf16.mxu0 0
    %321 = vmatpush1.bf16.msra.mxu0 0
    %322 = vmatprep.subr.bf16.mxu0 0
    %323 = vmatpush1.bf16.msra.mxu0 0
    %324 = vmatprep.subr.bf16.mxu0 0
    %325 = vmatpush1.bf16.msra.mxu0 0
    %326 = vmatprep.subr.bf16.mxu0 0
    %327 = vmatpush1.bf16.msra.mxu0 0
    %328 = vmatprep.subr.bf16.mxu0 0
    %329 = vmatpush1.bf16.msra.mxu0 0
    %330 = vmatprep.subr.bf16.mxu0 0
    %331 = vmatpush1.bf16.msra.mxu0 0
    %332 = vmatprep.mubr.bf16.mxu0 0
    %333 = vmatmul.mubr.bf16.gmra.mrb[0].mxu0 %v140
    %v334 = vpop.f32.mrb[0].mxu0
    %v335 = vadd.f32 %v274, %v334
    %v336 = vpop.f32.mrb[0].mxu0
    %v337 = vpop.f32.mrb[0].mxu0
    %v338 = vpop.f32.mrb[0].mxu0
    %339 = vdwg.mxu0
    %v340 = vmul.f32 %v177, %v61
    %v341 = vpack.c.bf16 %v177, %v177
    %v350 = vunpack.c.l.b16 %v63
    %v351 = vunpack.c.l.b16 %v64
    %v352 = vunpack.c.l.b16 %v65
    %v353 = vunpack.c.l.b16 %v66
    %v354 = vunpack.c.l.b16 %v67
    %v355 = vunpack.c.l.b16 %v68
    %v356 = vunpack.c.l.b16 %v69
    %v357 = vunpack.c.l.b16 %v70
    %v358 = vpack.c.b16 %v351, %v350
    %v359 = vpack.c.b16 %v353, %v352
    %v360 = vpack.c.b16 %v355, %v354
    %v361 = vpack.c.b16 %v357, %v356
    %v367 = vsel %vm83, %v341, 0
    %369 = vmatprep.subr.bf16.mxu0 0
    %370 = vmatpush1.bf16.msra.mxu0 %v358
    %371 = vmatprep.subr.bf16.mxu0 0
    %372 = vmatpush1.bf16.msra.mxu0 %v359
    %373 = vmatprep.subr.bf16.mxu0 0
    %374 = vmatpush1.bf16.msra.mxu0 %v360
    %375 = vmatprep.subr.bf16.mxu0 0
    %376 = vmatpush1.bf16.msra.mxu0 %v361
    %377 = vmatprep.subr.bf16.mxu0 0
    %378 = vmatpush1.bf16.msra.mxu0 0
    %379 = vmatprep.subr.bf16.mxu0 0
    %380 = vmatpush1.bf16.msra.mxu0 0
    %381 = vmatprep.subr.bf16.mxu0 0
    %382 = vmatpush1.bf16.msra.mxu0 0
    %383 = vmatprep.subr.bf16.mxu0 0
    %384 = vmatpush1.bf16.msra.mxu0 0
    %385 = vmatprep.subr.bf16.mxu0 0
    %386 = vmatpush1.bf16.msra.mxu0 0
    %387 = vmatprep.subr.bf16.mxu0 0
    %388 = vmatpush1.bf16.msra.mxu0 0
    %389 = vmatprep.subr.bf16.mxu0 0
    %390 = vmatpush1.bf16.msra.mxu0 0
    %391 = vmatprep.subr.bf16.mxu0 0
    %392 = vmatpush1.bf16.msra.mxu0 0
    %393 = vmatprep.subr.bf16.mxu0 0
    %394 = vmatpush1.bf16.msra.mxu0 0
    %395 = vmatprep.subr.bf16.mxu0 0
    %396 = vmatpush1.bf16.msra.mxu0 0
    %397 = vmatprep.subr.bf16.mxu0 0
    %398 = vmatpush1.bf16.msra.mxu0 0
    %399 = vmatprep.subr.bf16.mxu0 0
    %400 = vmatpush1.bf16.msra.mxu0 0
    %401 = vmatprep.mubr.bf16.mxu0 0
    %402 = vmatmul.mubr.bf16.gmra.mrb[0].mxu0 %v367
    %v403 = vpop.f32.mrb[0].mxu0
    %v404 = vadd.f32 0.0, %v403
    %v405 = vpop.f32.mrb[0].mxu0
    %v406 = vpop.f32.mrb[0].mxu0
    %v407 = vpop.f32.mrb[0].mxu0
    %408 = vdwg.mxu0
    %v409 = vmul.f32 %v404, %v62
    %v410 = vadd.f32 %v340, %v409
    %v411 = vmul.f32 %v256, %v61
    %v412 = vpack.c.bf16 %v256, %v256
    %v414 = vsel %vm83, %v412, 0
    %416 = vmatprep.subr.bf16.mxu0 0
    %417 = vmatpush1.bf16.msra.mxu0 %v358
    %418 = vmatprep.subr.bf16.mxu0 0
    %419 = vmatpush1.bf16.msra.mxu0 %v359
    %420 = vmatprep.subr.bf16.mxu0 0
    %421 = vmatpush1.bf16.msra.mxu0 %v360
    %422 = vmatprep.subr.bf16.mxu0 0
    %423 = vmatpush1.bf16.msra.mxu0 %v361
    %424 = vmatprep.subr.bf16.mxu0 0
    %425 = vmatpush1.bf16.msra.mxu0 0
    %426 = vmatprep.subr.bf16.mxu0 0
    %427 = vmatpush1.bf16.msra.mxu0 0
    %428 = vmatprep.subr.bf16.mxu0 0
    %429 = vmatpush1.bf16.msra.mxu0 0
    %430 = vmatprep.subr.bf16.mxu0 0
    %431 = vmatpush1.bf16.msra.mxu0 0
    %432 = vmatprep.subr.bf16.mxu0 0
    %433 = vmatpush1.bf16.msra.mxu0 0
    %434 = vmatprep.subr.bf16.mxu0 0
    %435 = vmatpush1.bf16.msra.mxu0 0
    %436 = vmatprep.subr.bf16.mxu0 0
    %437 = vmatpush1.bf16.msra.mxu0 0
    %438 = vmatprep.subr.bf16.mxu0 0
    %439 = vmatpush1.bf16.msra.mxu0 0
    %440 = vmatprep.subr.bf16.mxu0 0
    %441 = vmatpush1.bf16.msra.mxu0 0
    %442 = vmatprep.subr.bf16.mxu0 0
    %443 = vmatpush1.bf16.msra.mxu0 0
    %444 = vmatprep.subr.bf16.mxu0 0
    %445 = vmatpush1.bf16.msra.mxu0 0
    %446 = vmatprep.subr.bf16.mxu0 0
    %447 = vmatpush1.bf16.msra.mxu0 0
    %448 = vmatprep.mubr.bf16.mxu0 0
    %449 = vmatmul.mubr.bf16.gmra.mrb[0].mxu0 %v414
    %v450 = vpop.f32.mrb[0].mxu0
    %v451 = vadd.f32 0.0, %v450
    %v452 = vpop.f32.mrb[0].mxu0
    %v453 = vpop.f32.mrb[0].mxu0
    %v454 = vpop.f32.mrb[0].mxu0
    %455 = vdwg.mxu0
    %v456 = vmul.f32 %v451, %v62
    %v457 = vadd.f32 %v411, %v456
    %v458 = vmul.f32 %v410, %v71
    %v459 = vmul.f32 %v410, %v72
    %v460 = vmul.f32 %v410, %v73
    %v461 = vmul.f32 %v410, %v74
    %v462 = vpack.c.bf16 %v459, %v458
    %v463 = vpack.c.bf16 %v461, %v460
    %v464 = vpack.c.bf16 %v457, %v457
    %v466 = vsel %vm83, %v462, 0
    %v469 = vsel %vm83, %v463, 0
    %v472 = vsel %vm83, %v464, 0
    %474 = vmatprep.subr.bf16.mxu0 0
    %475 = vmatpush1.bf16.xpose.msra.mxu0 %v472
    %476 = vmatprep.subr.bf16.mxu0 0
    %477 = vmatpush1.bf16.xpose.msra.mxu0 0
    %478 = vmatprep.subr.bf16.mxu0 0
    %479 = vmatpush1.bf16.xpose.msra.mxu0 0
    %480 = vmatprep.subr.bf16.mxu0 0
    %481 = vmatpush1.bf16.xpose.msra.mxu0 0
    %482 = vmatprep.subr.bf16.mxu0 0
    %483 = vmatpush1.bf16.xpose.msra.mxu0 0
    %484 = vmatprep.subr.bf16.mxu0 0
    %485 = vmatpush1.bf16.xpose.msra.mxu0 0
    %486 = vmatprep.subr.bf16.mxu0 0
    %487 = vmatpush1.bf16.xpose.msra.mxu0 0
    %488 = vmatprep.subr.bf16.mxu0 0
    %489 = vmatpush1.bf16.xpose.msra.mxu0 0
    %490 = vmatprep.subr.bf16.mxu0 0
    %491 = vmatpush1.bf16.xpose.msra.mxu0 0
    %492 = vmatprep.subr.bf16.mxu0 0
    %493 = vmatpush1.bf16.xpose.msra.mxu0 0
    %494 = vmatprep.subr.bf16.mxu0 0
    %495 = vmatpush1.bf16.xpose.msra.mxu0 0
    %496 = vmatprep.subr.bf16.mxu0 0
    %497 = vmatpush1.bf16.xpose.msra.mxu0 0
    %498 = vmatprep.subr.bf16.mxu0 0
    %499 = vmatpush1.bf16.xpose.msra.mxu0 0
    %500 = vmatprep.subr.bf16.mxu0 0
    %501 = vmatpush1.bf16.xpose.msra.mxu0 0
    %502 = vmatprep.subr.bf16.mxu0 0
    %503 = vmatpush1.bf16.xpose.msra.mxu0 0
    %504 = vmatprep.subr.bf16.mxu0 0
    %505 = vmatpush1.bf16.xpose.msra.mxu0 0
    %506 = vmatprep.mubr.bf16.mxu0 0
    %507 = vmatmul.mubr.bf16.gmra.mrb[0].mxu0 %v466
    %v508 = vpop.f32.mrb[0].mxu0
    %v509 = vadd.f32 %v75, %v508
    %v510 = vpop.f32.mrb[0].mxu0
    %v511 = vpop.f32.mrb[0].mxu0
    %v512 = vadd.f32 %v76, %v511
    %v513 = vpop.f32.mrb[0].mxu0
    %514 = vmatprep.mubr.bf16.mxu0 0
    %515 = vmatmul.mubr.bf16.gmra.mrb[0].mxu0 %v469
    %v516 = vpop.f32.mrb[0].mxu0
    %v517 = vadd.f32 %v77, %v516
    %v518 = vpop.f32.mrb[0].mxu0
    %v519 = vpop.f32.mrb[0].mxu0
    %v520 = vadd.f32 %v78, %v519
    %v521 = vpop.f32.mrb[0].mxu0
    %522 = vdwg.mxu0
    %vm523 = vcmask 64512
    %v524 = vsel %vm523, %v509, -inf
    %525 = vmax.xlane.f32.xlu0 %v524
    %v526 = vpop.xlane.xlu0 %525
    %v527 = vsel %vm523, %v512, -inf
    %528 = vmax.xlane.f32.xlu0 %v527
    %v529 = vpop.xlane.xlu0 %528
    %v530 = vsel %vm523, %v517, -inf
    %531 = vmax.xlane.f32.xlu0 %v530
    %v532 = vpop.xlane.xlu0 %531
    %v533 = vsel %vm523, %v520, -inf
    %534 = vmax.xlane.f32.xlu0 %v533
    %v535 = vpop.xlane.xlu0 %534
    %v536 = vsub.f32 %v509, %v526
    %v537 = vsub.f32 %v512, %v529
    %v538 = vsub.f32 %v517, %v532
    %v539 = vsub.f32 %v520, %v535
    %v540 = vmul.f32 %v536, 1.442695
    %v541 = vpow.pop %v540
    %v542 = vmul.f32 %v537, 1.442695
    %v543 = vpow.pop %v542
    %v544 = vmul.f32 %v538, 1.442695
    %v545 = vpow.pop %v544
    %v546 = vmul.f32 %v539, 1.442695
    %v547 = vpow.pop %v546
    %v548 = vsel %vm523, %v541, 0.0
    %549 = vadd.xlane.f32.xlu0 %v548
    %v550 = vpop.xlane.xlu0 %549
    %v551 = vsel %vm523, %v543, 0.0
    %552 = vadd.xlane.f32.xlu0 %v551
    %v553 = vpop.xlane.xlu0 %552
    %v554 = vsel %vm523, %v545, 0.0
    %555 = vadd.xlane.f32.xlu0 %v554
    %v556 = vpop.xlane.xlu0 %555
    %v557 = vsel %vm523, %v547, 0.0
    %558 = vadd.xlane.f32.xlu0 %v557
    %v559 = vpop.xlane.xlu0 %558
    %v560 = vrcp.pop %v550
    %v561 = vrcp.pop %v553
    %v562 = vrcp.pop %v556
    %v563 = vrcp.pop %v559
    %v564 = vmul.f32 %v541, %v560
    %v565 = vmul.f32 %v543, %v561
    %v566 = vmul.f32 %v545, %v562
    %v567 = vmul.f32 %v547, %v563
    %v568 = vpack.c.bf16 %v565, %v564
    %v569 = vpack.c.bf16 %v567, %v566
    %v570 = vpack.c.bf16 %v335, %v335
    %v572 = vsel %vm523, %v568, 0
    %v575 = vsel %vm523, %v569, 0
    %vm577 = vcmask 1043456
    %v579 = vsel %vm577, %v570, 0
    %581 = vmatprep.subr.bf16.mxu0 0
    %582 = vmatpush1.bf16.msra.mxu0 %v579
    %583 = vmatprep.subr.bf16.mxu0 0
    %584 = vmatpush1.bf16.msra.mxu0 0
    %585 = vmatprep.subr.bf16.mxu0 0
    %586 = vmatpush1.bf16.msra.mxu0 0
    %587 = vmatprep.subr.bf16.mxu0 0
    %588 = vmatpush1.bf16.msra.mxu0 0
    %589 = vmatprep.subr.bf16.mxu0 0
    %590 = vmatpush1.bf16.msra.mxu0 0
    %591 = vmatprep.subr.bf16.mxu0 0
    %592 = vmatpush1.bf16.msra.mxu0 0
    %593 = vmatprep.subr.bf16.mxu0 0
    %594 = vmatpush1.bf16.msra.mxu0 0
    %595 = vmatprep.subr.bf16.mxu0 0
    %596 = vmatpush1.bf16.msra.mxu0 0
    %597 = vmatprep.subr.bf16.mxu0 0
    %598 = vmatpush1.bf16.msra.mxu0 0
    %599 = vmatprep.subr.bf16.mxu0 0
    %600 = vmatpush1.bf16.msra.mxu0 0
    %601 = vmatprep.subr.bf16.mxu0 0
    %602 = vmatpush1.bf16.msra.mxu0 0
    %603 = vmatprep.subr.bf16.mxu0 0
    %604 = vmatpush1.bf16.msra.mxu0 0
    %605 = vmatprep.subr.bf16.mxu0 0
    %606 = vmatpush1.bf16.msra.mxu0 0
    %607 = vmatprep.subr.bf16.mxu0 0
    %608 = vmatpush1.bf16.msra.mxu0 0
    %609 = vmatprep.subr.bf16.mxu0 0
    %610 = vmatpush1.bf16.msra.mxu0 0
    %611 = vmatprep.subr.bf16.mxu0 0
    %612 = vmatpush1.bf16.msra.mxu0 0
    %613 = vmatprep.mubr.bf16.mxu0 0
    %614 = vmatmul.mubr.bf16.gmra.mrb[0].mxu0 %v572
    %v615 = vpop.f32.mrb[0].mxu0
    %v616 = vadd.f32 0.0, %v615
    %v617 = vpop.f32.mrb[0].mxu0
    %v618 = vpop.f32.mrb[0].mxu0
    %v619 = vadd.f32 0.0, %v618
    %v620 = vpop.f32.mrb[0].mxu0
    %621 = vmatprep.mubr.bf16.mxu0 0
    %622 = vmatmul.mubr.bf16.gmra.mrb[0].mxu0 %v575
    %v623 = vpop.f32.mrb[0].mxu0
    %v624 = vadd.f32 0.0, %v623
    %v625 = vpop.f32.mrb[0].mxu0
    %v626 = vpop.f32.mrb[0].mxu0
    %v627 = vadd.f32 0.0, %v626
    %v628 = vpop.f32.mrb[0].mxu0
    %629 = vdwg.mxu0
    %v630 = vmul.f32 %v616, %v71
    %v631 = vmul.f32 %v619, %v72
    %v632 = vmul.f32 %v624, %v73
    %v633 = vmul.f32 %v627, %v74
    %v634 = vadd.f32 %v630, %v631
    %v635 = vadd.f32 %v634, %v632
    %v636 = vadd.f32 %v635, %v633
    %v637 = vld [vmem:[%s14] sm:$0xf]
    %v638 = vld [vmem:[%s14 + $0x4] sm:$0xf]
    %v639 = vld [vmem:[%s14 + $0x8] sm:$0xf]
    %v640 = vld [vmem:[%s14 + $0xc] sm:$0xf]
    %v641 = vld [vmem:[%s14 + $0x10] sm:$0xf]
    %v642 = vld [vmem:[%s14 + $0x14] sm:$0xf]
    %v643 = vld [vmem:[%s14 + $0x18] sm:$0xf]
    %v644 = vld [vmem:[%s14 + $0x1c] sm:$0xf]
    %v645 = vpack.c.bf16 %v636, %v636
    %v654 = vunpack.c.l.b16 %v637
    %v655 = vunpack.c.l.b16 %v638
    %v656 = vunpack.c.l.b16 %v639
    %v657 = vunpack.c.l.b16 %v640
    %v658 = vunpack.c.l.b16 %v641
    %v659 = vunpack.c.l.b16 %v642
    %v660 = vunpack.c.l.b16 %v643
    %v661 = vunpack.c.l.b16 %v644
    %v662 = vpack.c.b16 %v655, %v654
    %v663 = vpack.c.b16 %v657, %v656
    %v664 = vpack.c.b16 %v659, %v658
    %v665 = vpack.c.b16 %v661, %v660
    %v671 = vsel %vm83, %v645, 0
    %673 = vmatprep.subr.bf16.mxu0 0
    %674 = vmatpush1.bf16.msra.mxu0 %v662
    %675 = vmatprep.subr.bf16.mxu0 0
    %676 = vmatpush1.bf16.msra.mxu0 %v663
    %677 = vmatprep.subr.bf16.mxu0 0
    %678 = vmatpush1.bf16.msra.mxu0 %v664
    %679 = vmatprep.subr.bf16.mxu0 0
    %680 = vmatpush1.bf16.msra.mxu0 %v665
    %681 = vmatprep.subr.bf16.mxu0 0
    %682 = vmatpush1.bf16.msra.mxu0 0
    %683 = vmatprep.subr.bf16.mxu0 0
    %684 = vmatpush1.bf16.msra.mxu0 0
    %685 = vmatprep.subr.bf16.mxu0 0
    %686 = vmatpush1.bf16.msra.mxu0 0
    %687 = vmatprep.subr.bf16.mxu0 0
    %688 = vmatpush1.bf16.msra.mxu0 0
    %689 = vmatprep.subr.bf16.mxu0 0
    %690 = vmatpush1.bf16.msra.mxu0 0
    %691 = vmatprep.subr.bf16.mxu0 0
    %692 = vmatpush1.bf16.msra.mxu0 0
    %693 = vmatprep.subr.bf16.mxu0 0
    %694 = vmatpush1.bf16.msra.mxu0 0
    %695 = vmatprep.subr.bf16.mxu0 0
    %696 = vmatpush1.bf16.msra.mxu0 0
    %697 = vmatprep.subr.bf16.mxu0 0
    %698 = vmatpush1.bf16.msra.mxu0 0
    %699 = vmatprep.subr.bf16.mxu0 0
    %700 = vmatpush1.bf16.msra.mxu0 0
    %701 = vmatprep.subr.bf16.mxu0 0
    %702 = vmatpush1.bf16.msra.mxu0 0
    %703 = vmatprep.subr.bf16.mxu0 0
    %704 = vmatpush1.bf16.msra.mxu0 0
    %705 = vmatprep.mubr.bf16.mxu0 0
    %706 = vmatmul.mubr.bf16.gmra.mrb[0].mxu0 %v671
    %v707 = vpop.f32.mrb[0].mxu0
    %v708 = vadd.f32 %v80, %v707
    %v709 = vpop.f32.mrb[0].mxu0
    %v710 = vpop.f32.mrb[0].mxu0
    %v711 = vpop.f32.mrb[0].mxu0
    %712 = vdwg.mxu0
    %v713 = vld [vmem:[%s7] sm:$0x1]
    %v714 = vmul.f32 %v708, %v708
    %v715 = vsel %vm83, %v714, 0.0
    %716 = vadd.xlane.f32.xlu0 %v715
    %v717 = vpop.xlane.xlu0 %716
    %v718 = vmul.f32 %v717, %v87
    %v719 = vadd.f32 %v718, 1e-06
    %v720 = vrsqrt.pop %v719
    %v721 = vmul.f32 %v708, %v720
    %v723 = vlaneseq
    %v724 = vshrl.u32 %v723, 7
    %v725 = vsub.s32 0, %v724
    %v726 = vrot.slane %v713, %v725
    %v728 = vmul.f32 %v721, %v726
    %v729 = vld [vmem:[%s15] sm:$0xff]
    %v730 = vld [vmem:[%s15 + $0x8] sm:$0xff]
    %v731 = vld [vmem:[%s15 + $0x10] sm:$0xff]
    %v732 = vld [vmem:[%s15 + $0x18] sm:$0xff]
    %v733 = vld [vmem:[%s15 + $0x20] sm:$0xff]
    %v734 = vld [vmem:[%s15 + $0x28] sm:$0xff]
    %v735 = vld [vmem:[%s15 + $0x30] sm:$0xff]
    %v736 = vld [vmem:[%s15 + $0x38] sm:$0xff]
    %v737 = vpack.c.bf16 %v728, %v728
    %v746 = vunpack.c.l.b16 %v729
    %v747 = vunpack.c.h.b16 %v729
    %v748 = vunpack.c.l.b16 %v730
    %v749 = vunpack.c.h.b16 %v730
    %v750 = vunpack.c.l.b16 %v731
    %v751 = vunpack.c.h.b16 %v731
    %v752 = vunpack.c.l.b16 %v732
    %v753 = vunpack.c.h.b16 %v732
    %v754 = vunpack.c.l.b16 %v733
    %v755 = vunpack.c.h.b16 %v733
    %v756 = vunpack.c.l.b16 %v734
    %v757 = vunpack.c.h.b16 %v734
    %v758 = vunpack.c.l.b16 %v735
    %v759 = vunpack.c.h.b16 %v735
    %v760 = vunpack.c.l.b16 %v736
    %v761 = vunpack.c.h.b16 %v736
    %v762 = vpack.c.b16 %v748, %v746
    %v763 = vpack.c.b16 %v749, %v747
    %v764 = vpack.c.b16 %v752, %v750
    %v765 = vpack.c.b16 %v753, %v751
    %v766 = vpack.c.b16 %v756, %v754
    %v767 = vpack.c.b16 %v757, %v755
    %v768 = vpack.c.b16 %v760, %v758
    %v769 = vpack.c.b16 %v761, %v759
    %v779 = vsel %vm83, %v737, 0
    %781 = vmatprep.subr.bf16.mxu0 %v763
    %782 = vmatpush1.bf16.msra.mxu0 %v762
    %783 = vmatprep.subr.bf16.mxu0 %v765
    %784 = vmatpush1.bf16.msra.mxu0 %v764
    %785 = vmatprep.subr.bf16.mxu0 %v767
    %786 = vmatpush1.bf16.msra.mxu0 %v766
    %787 = vmatprep.subr.bf16.mxu0 %v769
    %788 = vmatpush1.bf16.msra.mxu0 %v768
    %789 = vmatprep.subr.bf16.mxu0 0
    %790 = vmatpush1.bf16.msra.mxu0 0
    %791 = vmatprep.subr.bf16.mxu0 0
    %792 = vmatpush1.bf16.msra.mxu0 0
    %793 = vmatprep.subr.bf16.mxu0 0
    %794 = vmatpush1.bf16.msra.mxu0 0
    %795 = vmatprep.subr.bf16.mxu0 0
    %796 = vmatpush1.bf16.msra.mxu0 0
    %797 = vmatprep.subr.bf16.mxu0 0
    %798 = vmatpush1.bf16.msra.mxu0 0
    %799 = vmatprep.subr.bf16.mxu0 0
    %800 = vmatpush1.bf16.msra.mxu0 0
    %801 = vmatprep.subr.bf16.mxu0 0
    %802 = vmatpush1.bf16.msra.mxu0 0
    %803 = vmatprep.subr.bf16.mxu0 0
    %804 = vmatpush1.bf16.msra.mxu0 0
    %805 = vmatprep.subr.bf16.mxu0 0
    %806 = vmatpush1.bf16.msra.mxu0 0
    %807 = vmatprep.subr.bf16.mxu0 0
    %808 = vmatpush1.bf16.msra.mxu0 0
    %809 = vmatprep.subr.bf16.mxu0 0
    %810 = vmatpush1.bf16.msra.mxu0 0
    %811 = vmatprep.subr.bf16.mxu0 0
    %812 = vmatpush1.bf16.msra.mxu0 0
    %813 = vmatprep.mubr.bf16.mxu0 0
    %814 = vmatmul.mubr.bf16.gmra.mrb[0].mxu0 %v779
    %v815 = vpop.f32.mrb[0].mxu0
    %v816 = vadd.f32 0.0, %v815
    %v817 = vpop.f32.mrb[0].mxu0
    %v818 = vadd.f32 0.0, %v817
    %v819 = vpop.f32.mrb[0].mxu0
    %v820 = vpop.f32.mrb[0].mxu0
    %821 = vdwg.mxu0
    %v822 = vxor.u32 %v816, 2147483648
    %v823 = vmul.f32 %v822, 1.442695
    %v824 = vpow.pop %v823
    %v825 = vadd.f32 %v824, 1.0
    %v826 = vrcp.pop %v825
    %v827 = vmul.f32 1.0, %v826
    %v828 = vmul.f32 %v816, %v827
    %v829 = vmul.f32 %v828, %v818
    %v830 = vld [vmem:[%s16] sm:$0xf]
    %v831 = vld [vmem:[%s16 + $0x4] sm:$0xf]
    %v832 = vld [vmem:[%s16 + $0x8] sm:$0xf]
    %v833 = vld [vmem:[%s16 + $0xc] sm:$0xf]
    %v834 = vld [vmem:[%s16 + $0x10] sm:$0xf]
    %v835 = vld [vmem:[%s16 + $0x14] sm:$0xf]
    %v836 = vld [vmem:[%s16 + $0x18] sm:$0xf]
    %v837 = vld [vmem:[%s16 + $0x1c] sm:$0xf]
    %v838 = vld [vmem:[%s16 + $0x20] sm:$0xf]
    %v839 = vld [vmem:[%s16 + $0x24] sm:$0xf]
    %v840 = vld [vmem:[%s16 + $0x28] sm:$0xf]
    %v841 = vld [vmem:[%s16 + $0x2c] sm:$0xf]
    %v842 = vld [vmem:[%s16 + $0x30] sm:$0xf]
    %v843 = vld [vmem:[%s16 + $0x34] sm:$0xf]
    %v844 = vld [vmem:[%s16 + $0x38] sm:$0xf]
    %v845 = vld [vmem:[%s16 + $0x3c] sm:$0xf]
    %v846 = vpack.c.bf16 %v829, %v829
    %v863 = vunpack.c.l.b16 %v830
    %v864 = vunpack.c.l.b16 %v831
    %v865 = vunpack.c.l.b16 %v832
    %v866 = vunpack.c.l.b16 %v833
    %v867 = vunpack.c.l.b16 %v834
    %v868 = vunpack.c.l.b16 %v835
    %v869 = vunpack.c.l.b16 %v836
    %v870 = vunpack.c.l.b16 %v837
    %v871 = vunpack.c.l.b16 %v838
    %v872 = vunpack.c.l.b16 %v839
    %v873 = vunpack.c.l.b16 %v840
    %v874 = vunpack.c.l.b16 %v841
    %v875 = vunpack.c.l.b16 %v842
    %v876 = vunpack.c.l.b16 %v843
    %v877 = vunpack.c.l.b16 %v844
    %v878 = vunpack.c.l.b16 %v845
    %v879 = vpack.c.b16 %v864, %v863
    %v880 = vpack.c.b16 %v866, %v865
    %v881 = vpack.c.b16 %v868, %v867
    %v882 = vpack.c.b16 %v870, %v869
    %v883 = vpack.c.b16 %v872, %v871
    %v884 = vpack.c.b16 %v874, %v873
    %v885 = vpack.c.b16 %v876, %v875
    %v886 = vpack.c.b16 %v878, %v877
    %895 = vmatprep.subr.bf16.mxu0 0
    %896 = vmatpush1.bf16.msra.mxu0 %v879
    %897 = vmatprep.subr.bf16.mxu0 0
    %898 = vmatpush1.bf16.msra.mxu0 %v880
    %899 = vmatprep.subr.bf16.mxu0 0
    %900 = vmatpush1.bf16.msra.mxu0 %v881
    %901 = vmatprep.subr.bf16.mxu0 0
    %902 = vmatpush1.bf16.msra.mxu0 %v882
    %903 = vmatprep.subr.bf16.mxu0 0
    %904 = vmatpush1.bf16.msra.mxu0 %v883
    %905 = vmatprep.subr.bf16.mxu0 0
    %906 = vmatpush1.bf16.msra.mxu0 %v884
    %907 = vmatprep.subr.bf16.mxu0 0
    %908 = vmatpush1.bf16.msra.mxu0 %v885
    %909 = vmatprep.subr.bf16.mxu0 0
    %910 = vmatpush1.bf16.msra.mxu0 %v886
    %911 = vmatprep.subr.bf16.mxu0 0
    %912 = vmatpush1.bf16.msra.mxu0 0
    %913 = vmatprep.subr.bf16.mxu0 0
    %914 = vmatpush1.bf16.msra.mxu0 0
    %915 = vmatprep.subr.bf16.mxu0 0
    %916 = vmatpush1.bf16.msra.mxu0 0
    %917 = vmatprep.subr.bf16.mxu0 0
    %918 = vmatpush1.bf16.msra.mxu0 0
    %919 = vmatprep.subr.bf16.mxu0 0
    %920 = vmatpush1.bf16.msra.mxu0 0
    %921 = vmatprep.subr.bf16.mxu0 0
    %922 = vmatpush1.bf16.msra.mxu0 0
    %923 = vmatprep.subr.bf16.mxu0 0
    %924 = vmatpush1.bf16.msra.mxu0 0
    %925 = vmatprep.subr.bf16.mxu0 0
    %926 = vmatpush1.bf16.msra.mxu0 0
    %927 = vmatprep.mubr.bf16.mxu0 0
    %928 = vmatmul.mubr.bf16.gmra.mrb[0].mxu0 %v846
    %v929 = vpop.f32.mrb[0].mxu0
    %v930 = vadd.f32 %v708, %v929
    %v931 = vpop.f32.mrb[0].mxu0
    %v932 = vpop.f32.mrb[0].mxu0
    %v933 = vpop.f32.mrb[0].mxu0
    %934 = vdwg.mxu0
    %s935 = scalar_lea.vmem %s6, 1
    %v936 = vld [vmem:[%s935] sm:$0x1]
    %v937 = vmul.f32 %v930, %v930
    %v938 = vsel %vm83, %v937, 0.0
    %939 = vadd.xlane.f32.xlu0 %v938
    %v940 = vpop.xlane.xlu0 %939
    %v941 = vmul.f32 %v940, %v87
    %v942 = vadd.f32 %v941, 1e-06
    %v943 = vrsqrt.pop %v942
    %v944 = vmul.f32 %v930, %v943
    %v946 = vlaneseq
    %v947 = vshrl.u32 %v946, 7
    %v948 = vsub.s32 0, %v947
    %v949 = vrot.slane %v936, %v948
    %v951 = vmul.f32 %v944, %v949
    %s952 = scalar_lea.vmem %s8, 32
    %v953 = vld [vmem:[%s952] sm:$0xf]
    %v954 = vld [vmem:[%s952 + $0x4] sm:$0xf]
    %v955 = vld [vmem:[%s952 + $0x8] sm:$0xf]
    %v956 = vld [vmem:[%s952 + $0xc] sm:$0xf]
    %v957 = vld [vmem:[%s952 + $0x10] sm:$0xf]
    %v958 = vld [vmem:[%s952 + $0x14] sm:$0xf]
    %v959 = vld [vmem:[%s952 + $0x18] sm:$0xf]
    %v960 = vld [vmem:[%s952 + $0x1c] sm:$0xf]
    %s961 = scalar_lea.vmem %s9, 1
    %v962 = vld [vmem:[%s961] sm:$0x1]
    %v963 = vpack.c.bf16 %v951, %v951
    %v965 = vlaneseq
    %v966 = vshrl.u32 %v965, 7
    %v967 = vsub.s32 0, %v966
    %v968 = vrot.slane %v962, %v967
    %v978 = vunpack.c.l.b16 %v953
    %v979 = vunpack.c.l.b16 %v954
    %v980 = vunpack.c.l.b16 %v955
    %v981 = vunpack.c.l.b16 %v956
    %v982 = vunpack.c.l.b16 %v957
    %v983 = vunpack.c.l.b16 %v958
    %v984 = vunpack.c.l.b16 %v959
    %v985 = vunpack.c.l.b16 %v960
    %v986 = vpack.c.b16 %v979, %v978
    %v987 = vpack.c.b16 %v981, %v980
    %v988 = vpack.c.b16 %v983, %v982
    %v989 = vpack.c.b16 %v985, %v984
    %v995 = vsel %vm83, %v963, 0
    %997 = vmatprep.subr.bf16.mxu0 0
    %998 = vmatpush1.bf16.msra.mxu0 %v986
    %999 = vmatprep.subr.bf16.mxu0 0
    %1000 = vmatpush1.bf16.msra.mxu0 %v987
    %1001 = vmatprep.subr.bf16.mxu0 0
    %1002 = vmatpush1.bf16.msra.mxu0 %v988
    %1003 = vmatprep.subr.bf16.mxu0 0
    %1004 = vmatpush1.bf16.msra.mxu0 %v989
    %1005 = vmatprep.subr.bf16.mxu0 0
    %1006 = vmatpush1.bf16.msra.mxu0 0
    %1007 = vmatprep.subr.bf16.mxu0 0
    %1008 = vmatpush1.bf16.msra.mxu0 0
    %1009 = vmatprep.subr.bf16.mxu0 0
    %1010 = vmatpush1.bf16.msra.mxu0 0
    %1011 = vmatprep.subr.bf16.mxu0 0
    %1012 = vmatpush1.bf16.msra.mxu0 0
    %1013 = vmatprep.subr.bf16.mxu0 0
    %1014 = vmatpush1.bf16.msra.mxu0 0
    %1015 = vmatprep.subr.bf16.mxu0 0
    %1016 = vmatpush1.bf16.msra.mxu0 0
    %1017 = vmatprep.subr.bf16.mxu0 0
    %1018 = vmatpush1.bf16.msra.mxu0 0
    %1019 = vmatprep.subr.bf16.mxu0 0
    %1020 = vmatpush1.bf16.msra.mxu0 0
    %1021 = vmatprep.subr.bf16.mxu0 0
    %1022 = vmatpush1.bf16.msra.mxu0 0
    %1023 = vmatprep.subr.bf16.mxu0 0
    %1024 = vmatpush1.bf16.msra.mxu0 0
    %1025 = vmatprep.subr.bf16.mxu0 0
    %1026 = vmatpush1.bf16.msra.mxu0 0
    %1027 = vmatprep.subr.bf16.mxu0 0
    %1028 = vmatpush1.bf16.msra.mxu0 0
    %1029 = vmatprep.mubr.bf16.mxu0 0
    %1030 = vmatmul.mubr.bf16.gmra.mrb[0].mxu0 %v995
    %v1031 = vpop.f32.mrb[0].mxu0
    %v1032 = vadd.f32 %v968, %v1031
    %v1033 = vpop.f32.mrb[0].mxu0
    %v1034 = vpop.f32.mrb[0].mxu0
    %v1035 = vpop.f32.mrb[0].mxu0
    %1036 = vdwg.mxu0
    %s1037 = scalar_lea.vmem %s10, 32
    %v1038 = vld [vmem:[%s1037] sm:$0xf]
    %v1039 = vld [vmem:[%s1037 + $0x4] sm:$0xf]
    %v1040 = vld [vmem:[%s1037 + $0x8] sm:$0xf]
    %v1041 = vld [vmem:[%s1037 + $0xc] sm:$0xf]
    %v1042 = vld [vmem:[%s1037 + $0x10] sm:$0xf]
    %v1043 = vld [vmem:[%s1037 + $0x14] sm:$0xf]
    %v1044 = vld [vmem:[%s1037 + $0x18] sm:$0xf]
    %v1045 = vld [vmem:[%s1037 + $0x1c] sm:$0xf]
    %s1046 = scalar_lea.vmem %s11, 1
    %v1047 = vld [vmem:[%s1046] sm:$0x1]
    %v1049 = vlaneseq
    %v1050 = vshrl.u32 %v1049, 7
    %v1051 = vsub.s32 0, %v1050
    %v1052 = vrot.slane %v1047, %v1051
    %v1062 = vunpack.c.l.b16 %v1038
    %v1063 = vunpack.c.l.b16 %v1039
    %v1064 = vunpack.c.l.b16 %v1040
    %v1065 = vunpack.c.l.b16 %v1041
    %v1066 = vunpack.c.l.b16 %v1042
    %v1067 = vunpack.c.l.b16 %v1043
    %v1068 = vunpack.c.l.b16 %v1044
    %v1069 = vunpack.c.l.b16 %v1045
    %v1070 = vpack.c.b16 %v1063, %v1062
    %v1071 = vpack.c.b16 %v1065, %v1064
    %v1072 = vpack.c.b16 %v1067, %v1066
    %v1073 = vpack.c.b16 %v1069, %v1068
    %1078 = vmatprep.subr.bf16.mxu0 0
    %1079 = vmatpush1.bf16.msra.mxu0 %v1070
    %1080 = vmatprep.subr.bf16.mxu0 0
    %1081 = vmatpush1.bf16.msra.mxu0 %v1071
    %1082 = vmatprep.subr.bf16.mxu0 0
    %1083 = vmatpush1.bf16.msra.mxu0 %v1072
    %1084 = vmatprep.subr.bf16.mxu0 0
    %1085 = vmatpush1.bf16.msra.mxu0 %v1073
    %1086 = vmatprep.subr.bf16.mxu0 0
    %1087 = vmatpush1.bf16.msra.mxu0 0
    %1088 = vmatprep.subr.bf16.mxu0 0
    %1089 = vmatpush1.bf16.msra.mxu0 0
    %1090 = vmatprep.subr.bf16.mxu0 0
    %1091 = vmatpush1.bf16.msra.mxu0 0
    %1092 = vmatprep.subr.bf16.mxu0 0
    %1093 = vmatpush1.bf16.msra.mxu0 0
    %1094 = vmatprep.subr.bf16.mxu0 0
    %1095 = vmatpush1.bf16.msra.mxu0 0
    %1096 = vmatprep.subr.bf16.mxu0 0
    %1097 = vmatpush1.bf16.msra.mxu0 0
    %1098 = vmatprep.subr.bf16.mxu0 0
    %1099 = vmatpush1.bf16.msra.mxu0 0
    %1100 = vmatprep.subr.bf16.mxu0 0
    %1101 = vmatpush1.bf16.msra.mxu0 0
    %1102 = vmatprep.subr.bf16.mxu0 0
    %1103 = vmatpush1.bf16.msra.mxu0 0
    %1104 = vmatprep.subr.bf16.mxu0 0
    %1105 = vmatpush1.bf16.msra.mxu0 0
    %1106 = vmatprep.subr.bf16.mxu0 0
    %1107 = vmatpush1.bf16.msra.mxu0 0
    %1108 = vmatprep.subr.bf16.mxu0 0
    %1109 = vmatpush1.bf16.msra.mxu0 0
    %1110 = vmatprep.mubr.bf16.mxu0 0
    %1111 = vmatmul.mubr.bf16.gmra.mrb[0].mxu0 %v995
    %v1112 = vpop.f32.mrb[0].mxu0
    %v1113 = vadd.f32 %v1052, %v1112
    %v1114 = vpop.f32.mrb[0].mxu0
    %v1115 = vpop.f32.mrb[0].mxu0
    %v1116 = vpop.f32.mrb[0].mxu0
    %1117 = vdwg.mxu0
    %s1118 = scalar_lea.vmem %s12, 32
    %v1119 = vld [vmem:[%s1118] sm:$0xf]
    %v1120 = vld [vmem:[%s1118 + $0x4] sm:$0xf]
    %v1121 = vld [vmem:[%s1118 + $0x8] sm:$0xf]
    %v1122 = vld [vmem:[%s1118 + $0xc] sm:$0xf]
    %v1123 = vld [vmem:[%s1118 + $0x10] sm:$0xf]
    %v1124 = vld [vmem:[%s1118 + $0x14] sm:$0xf]
    %v1125 = vld [vmem:[%s1118 + $0x18] sm:$0xf]
    %v1126 = vld [vmem:[%s1118 + $0x1c] sm:$0xf]
    %s1127 = scalar_lea.vmem %s13, 1
    %v1128 = vld [vmem:[%s1127] sm:$0x1]
    %v1130 = vlaneseq
    %v1131 = vshrl.u32 %v1130, 7
    %v1132 = vsub.s32 0, %v1131
    %v1133 = vrot.slane %v1128, %v1132
    %v1143 = vunpack.c.l.b16 %v1119
    %v1144 = vunpack.c.l.b16 %v1120
    %v1145 = vunpack.c.l.b16 %v1121
    %v1146 = vunpack.c.l.b16 %v1122
    %v1147 = vunpack.c.l.b16 %v1123
    %v1148 = vunpack.c.l.b16 %v1124
    %v1149 = vunpack.c.l.b16 %v1125
    %v1150 = vunpack.c.l.b16 %v1126
    %v1151 = vpack.c.b16 %v1144, %v1143
    %v1152 = vpack.c.b16 %v1146, %v1145
    %v1153 = vpack.c.b16 %v1148, %v1147
    %v1154 = vpack.c.b16 %v1150, %v1149
    %1159 = vmatprep.subr.bf16.mxu0 0
    %1160 = vmatpush1.bf16.msra.mxu0 %v1151
    %1161 = vmatprep.subr.bf16.mxu0 0
    %1162 = vmatpush1.bf16.msra.mxu0 %v1152
    %1163 = vmatprep.subr.bf16.mxu0 0
    %1164 = vmatpush1.bf16.msra.mxu0 %v1153
    %1165 = vmatprep.subr.bf16.mxu0 0
    %1166 = vmatpush1.bf16.msra.mxu0 %v1154
    %1167 = vmatprep.subr.bf16.mxu0 0
    %1168 = vmatpush1.bf16.msra.mxu0 0
    %1169 = vmatprep.subr.bf16.mxu0 0
    %1170 = vmatpush1.bf16.msra.mxu0 0
    %1171 = vmatprep.subr.bf16.mxu0 0
    %1172 = vmatpush1.bf16.msra.mxu0 0
    %1173 = vmatprep.subr.bf16.mxu0 0
    %1174 = vmatpush1.bf16.msra.mxu0 0
    %1175 = vmatprep.subr.bf16.mxu0 0
    %1176 = vmatpush1.bf16.msra.mxu0 0
    %1177 = vmatprep.subr.bf16.mxu0 0
    %1178 = vmatpush1.bf16.msra.mxu0 0
    %1179 = vmatprep.subr.bf16.mxu0 0
    %1180 = vmatpush1.bf16.msra.mxu0 0
    %1181 = vmatprep.subr.bf16.mxu0 0
    %1182 = vmatpush1.bf16.msra.mxu0 0
    %1183 = vmatprep.subr.bf16.mxu0 0
    %1184 = vmatpush1.bf16.msra.mxu0 0
    %1185 = vmatprep.subr.bf16.mxu0 0
    %1186 = vmatpush1.bf16.msra.mxu0 0
    %1187 = vmatprep.subr.bf16.mxu0 0
    %1188 = vmatpush1.bf16.msra.mxu0 0
    %1189 = vmatprep.subr.bf16.mxu0 0
    %1190 = vmatpush1.bf16.msra.mxu0 0
    %1191 = vmatprep.mubr.bf16.mxu0 0
    %1192 = vmatmul.mubr.bf16.gmra.mrb[0].mxu0 %v995
    %v1193 = vpop.f32.mrb[0].mxu0
    %v1194 = vadd.f32 %v1133, %v1193
    %v1195 = vpop.f32.mrb[0].mxu0
    %v1196 = vpop.f32.mrb[0].mxu0
    %v1197 = vpop.f32.mrb[0].mxu0
    %1198 = vdwg.mxu0
    %v1199 = vmul.f32 %v1032, %v61
    %v1200 = vpack.c.bf16 %v1032, %v1032
    %v1202 = vsel %vm83, %v1200, 0
    %1204 = vmatprep.subr.bf16.mxu0 0
    %1205 = vmatpush1.bf16.msra.mxu0 %v358
    %1206 = vmatprep.subr.bf16.mxu0 0
    %1207 = vmatpush1.bf16.msra.mxu0 %v359
    %1208 = vmatprep.subr.bf16.mxu0 0
    %1209 = vmatpush1.bf16.msra.mxu0 %v360
    %1210 = vmatprep.subr.bf16.mxu0 0
    %1211 = vmatpush1.bf16.msra.mxu0 %v361
    %1212 = vmatprep.subr.bf16.mxu0 0
    %1213 = vmatpush1.bf16.msra.mxu0 0
    %1214 = vmatprep.subr.bf16.mxu0 0
    %1215 = vmatpush1.bf16.msra.mxu0 0
    %1216 = vmatprep.subr.bf16.mxu0 0
    %1217 = vmatpush1.bf16.msra.mxu0 0
    %1218 = vmatprep.subr.bf16.mxu0 0
    %1219 = vmatpush1.bf16.msra.mxu0 0
    %1220 = vmatprep.subr.bf16.mxu0 0
    %1221 = vmatpush1.bf16.msra.mxu0 0
    %1222 = vmatprep.subr.bf16.mxu0 0
    %1223 = vmatpush1.bf16.msra.mxu0 0
    %1224 = vmatprep.subr.bf16.mxu0 0
    %1225 = vmatpush1.bf16.msra.mxu0 0
    %1226 = vmatprep.subr.bf16.mxu0 0
    %1227 = vmatpush1.bf16.msra.mxu0 0
    %1228 = vmatprep.subr.bf16.mxu0 0
    %1229 = vmatpush1.bf16.msra.mxu0 0
    %1230 = vmatprep.subr.bf16.mxu0 0
    %1231 = vmatpush1.bf16.msra.mxu0 0
    %1232 = vmatprep.subr.bf16.mxu0 0
    %1233 = vmatpush1.bf16.msra.mxu0 0
    %1234 = vmatprep.subr.bf16.mxu0 0
    %1235 = vmatpush1.bf16.msra.mxu0 0
    %1236 = vmatprep.mubr.bf16.mxu0 0
    %1237 = vmatmul.mubr.bf16.gmra.mrb[0].mxu0 %v1202
    %v1238 = vpop.f32.mrb[0].mxu0
    %v1239 = vadd.f32 0.0, %v1238
    %v1240 = vpop.f32.mrb[0].mxu0
    %v1241 = vpop.f32.mrb[0].mxu0
    %v1242 = vpop.f32.mrb[0].mxu0
    %1243 = vdwg.mxu0
    %v1244 = vmul.f32 %v1239, %v62
    %v1245 = vadd.f32 %v1199, %v1244
    %v1246 = vmul.f32 %v1113, %v61
    %v1247 = vpack.c.bf16 %v1113, %v1113
    %v1249 = vsel %vm83, %v1247, 0
    %1251 = vmatprep.subr.bf16.mxu0 0
    %1252 = vmatpush1.bf16.msra.mxu0 %v358
    %1253 = vmatprep.subr.bf16.mxu0 0
    %1254 = vmatpush1.bf16.msra.mxu0 %v359
    %1255 = vmatprep.subr.bf16.mxu0 0
    %1256 = vmatpush1.bf16.msra.mxu0 %v360
    %1257 = vmatprep.subr.bf16.mxu0 0
    %1258 = vmatpush1.bf16.msra.mxu0 %v361
    %1259 = vmatprep.subr.bf16.mxu0 0
    %1260 = vmatpush1.bf16.msra.mxu0 0
    %1261 = vmatprep.subr.bf16.mxu0 0
    %1262 = vmatpush1.bf16.msra.mxu0 0
    %1263 = vmatprep.subr.bf16.mxu0 0
    %1264 = vmatpush1.bf16.msra.mxu0 0
    %1265 = vmatprep.subr.bf16.mxu0 0
    %1266 = vmatpush1.bf16.msra.mxu0 0
    %1267 = vmatprep.subr.bf16.mxu0 0
    %1268 = vmatpush1.bf16.msra.mxu0 0
    %1269 = vmatprep.subr.bf16.mxu0 0
    %1270 = vmatpush1.bf16.msra.mxu0 0
    %1271 = vmatprep.subr.bf16.mxu0 0
    %1272 = vmatpush1.bf16.msra.mxu0 0
    %1273 = vmatprep.subr.bf16.mxu0 0
    %1274 = vmatpush1.bf16.msra.mxu0 0
    %1275 = vmatprep.subr.bf16.mxu0 0
    %1276 = vmatpush1.bf16.msra.mxu0 0
    %1277 = vmatprep.subr.bf16.mxu0 0
    %1278 = vmatpush1.bf16.msra.mxu0 0
    %1279 = vmatprep.subr.bf16.mxu0 0
    %1280 = vmatpush1.bf16.msra.mxu0 0
    %1281 = vmatprep.subr.bf16.mxu0 0
    %1282 = vmatpush1.bf16.msra.mxu0 0
    %1283 = vmatprep.mubr.bf16.mxu0 0
    %1284 = vmatmul.mubr.bf16.gmra.mrb[0].mxu0 %v1249
    %v1285 = vpop.f32.mrb[0].mxu0
    %v1286 = vadd.f32 0.0, %v1285
    %v1287 = vpop.f32.mrb[0].mxu0
    %v1288 = vpop.f32.mrb[0].mxu0
    %v1289 = vpop.f32.mrb[0].mxu0
    %1290 = vdwg.mxu0
    %v1291 = vmul.f32 %v1286, %v62
    %v1292 = vadd.f32 %v1246, %v1291
    %v1293 = vmul.f32 %v1245, %v71
    %v1294 = vmul.f32 %v1245, %v72
    %v1295 = vmul.f32 %v1245, %v73
    %v1296 = vmul.f32 %v1245, %v74
    %v1297 = vpack.c.bf16 %v1294, %v1293
    %v1298 = vpack.c.bf16 %v1296, %v1295
    %v1299 = vpack.c.bf16 %v1292, %v1292
    %v1301 = vsel %vm83, %v1297, 0
    %v1304 = vsel %vm83, %v1298, 0
    %v1307 = vsel %vm83, %v1299, 0
    %1309 = vmatprep.subr.bf16.mxu0 0
    %1310 = vmatpush1.bf16.xpose.msra.mxu0 %v1307
    %1311 = vmatprep.subr.bf16.mxu0 0
    %1312 = vmatpush1.bf16.xpose.msra.mxu0 0
    %1313 = vmatprep.subr.bf16.mxu0 0
    %1314 = vmatpush1.bf16.xpose.msra.mxu0 0
    %1315 = vmatprep.subr.bf16.mxu0 0
    %1316 = vmatpush1.bf16.xpose.msra.mxu0 0
    %1317 = vmatprep.subr.bf16.mxu0 0
    %1318 = vmatpush1.bf16.xpose.msra.mxu0 0
    %1319 = vmatprep.subr.bf16.mxu0 0
    %1320 = vmatpush1.bf16.xpose.msra.mxu0 0
    %1321 = vmatprep.subr.bf16.mxu0 0
    %1322 = vmatpush1.bf16.xpose.msra.mxu0 0
    %1323 = vmatprep.subr.bf16.mxu0 0
    %1324 = vmatpush1.bf16.xpose.msra.mxu0 0
    %1325 = vmatprep.subr.bf16.mxu0 0
    %1326 = vmatpush1.bf16.xpose.msra.mxu0 0
    %1327 = vmatprep.subr.bf16.mxu0 0
    %1328 = vmatpush1.bf16.xpose.msra.mxu0 0
    %1329 = vmatprep.subr.bf16.mxu0 0
    %1330 = vmatpush1.bf16.xpose.msra.mxu0 0
    %1331 = vmatprep.subr.bf16.mxu0 0
    %1332 = vmatpush1.bf16.xpose.msra.mxu0 0
    %1333 = vmatprep.subr.bf16.mxu0 0
    %1334 = vmatpush1.bf16.xpose.msra.mxu0 0
    %1335 = vmatprep.subr.bf16.mxu0 0
    %1336 = vmatpush1.bf16.xpose.msra.mxu0 0
    %1337 = vmatprep.subr.bf16.mxu0 0
    %1338 = vmatpush1.bf16.xpose.msra.mxu0 0
    %1339 = vmatprep.subr.bf16.mxu0 0
    %1340 = vmatpush1.bf16.xpose.msra.mxu0 0
    %1341 = vmatprep.mubr.bf16.mxu0 0
    %1342 = vmatmul.mubr.bf16.gmra.mrb[0].mxu0 %v1301
    %v1343 = vpop.f32.mrb[0].mxu0
    %v1344 = vadd.f32 %v75, %v1343
    %v1345 = vpop.f32.mrb[0].mxu0
    %v1346 = vpop.f32.mrb[0].mxu0
    %v1347 = vadd.f32 %v76, %v1346
    %v1348 = vpop.f32.mrb[0].mxu0
    %1349 = vmatprep.mubr.bf16.mxu0 0
    %1350 = vmatmul.mubr.bf16.gmra.mrb[0].mxu0 %v1304
    %v1351 = vpop.f32.mrb[0].mxu0
    %v1352 = vadd.f32 %v77, %v1351
    %v1353 = vpop.f32.mrb[0].mxu0
    %v1354 = vpop.f32.mrb[0].mxu0
    %v1355 = vadd.f32 %v78, %v1354
    %v1356 = vpop.f32.mrb[0].mxu0
    %1357 = vdwg.mxu0
    %v1358 = vsel %vm523, %v1344, -inf
    %1359 = vmax.xlane.f32.xlu0 %v1358
    %v1360 = vpop.xlane.xlu0 %1359
    %v1361 = vsel %vm523, %v1347, -inf
    %1362 = vmax.xlane.f32.xlu0 %v1361
    %v1363 = vpop.xlane.xlu0 %1362
    %v1364 = vsel %vm523, %v1352, -inf
    %1365 = vmax.xlane.f32.xlu0 %v1364
    %v1366 = vpop.xlane.xlu0 %1365
    %v1367 = vsel %vm523, %v1355, -inf
    %1368 = vmax.xlane.f32.xlu0 %v1367
    %v1369 = vpop.xlane.xlu0 %1368
    %v1370 = vsub.f32 %v1344, %v1360
    %v1371 = vsub.f32 %v1347, %v1363
    %v1372 = vsub.f32 %v1352, %v1366
    %v1373 = vsub.f32 %v1355, %v1369
    %v1374 = vmul.f32 %v1370, 1.442695
    %v1375 = vpow.pop %v1374
    %v1376 = vmul.f32 %v1371, 1.442695
    %v1377 = vpow.pop %v1376
    %v1378 = vmul.f32 %v1372, 1.442695
    %v1379 = vpow.pop %v1378
    %v1380 = vmul.f32 %v1373, 1.442695
    %v1381 = vpow.pop %v1380
    %v1382 = vsel %vm523, %v1375, 0.0
    %1383 = vadd.xlane.f32.xlu0 %v1382
    %v1384 = vpop.xlane.xlu0 %1383
    %v1385 = vsel %vm523, %v1377, 0.0
    %1386 = vadd.xlane.f32.xlu0 %v1385
    %v1387 = vpop.xlane.xlu0 %1386
    %v1388 = vsel %vm523, %v1379, 0.0
    %1389 = vadd.xlane.f32.xlu0 %v1388
    %v1390 = vpop.xlane.xlu0 %1389
    %v1391 = vsel %vm523, %v1381, 0.0
    %1392 = vadd.xlane.f32.xlu0 %v1391
    %v1393 = vpop.xlane.xlu0 %1392
    %v1394 = vrcp.pop %v1384
    %v1395 = vrcp.pop %v1387
    %v1396 = vrcp.pop %v1390
    %v1397 = vrcp.pop %v1393
    %v1398 = vmul.f32 %v1375, %v1394
    %v1399 = vmul.f32 %v1377, %v1395
    %v1400 = vmul.f32 %v1379, %v1396
    %v1401 = vmul.f32 %v1381, %v1397
    %v1402 = vpack.c.bf16 %v1399, %v1398
    %v1403 = vpack.c.bf16 %v1401, %v1400
    %v1404 = vpack.c.bf16 %v1194, %v1194
    %v1406 = vsel %vm523, %v1402, 0
    %v1409 = vsel %vm523, %v1403, 0
    %v1412 = vsel %vm577, %v1404, 0
    %1414 = vmatprep.subr.bf16.mxu0 0
    %1415 = vmatpush1.bf16.msra.mxu0 %v1412
    %1416 = vmatprep.subr.bf16.mxu0 0
    %1417 = vmatpush1.bf16.msra.mxu0 0
    %1418 = vmatprep.subr.bf16.mxu0 0
    %1419 = vmatpush1.bf16.msra.mxu0 0
    %1420 = vmatprep.subr.bf16.mxu0 0
    %1421 = vmatpush1.bf16.msra.mxu0 0
    %1422 = vmatprep.subr.bf16.mxu0 0
    %1423 = vmatpush1.bf16.msra.mxu0 0
    %1424 = vmatprep.subr.bf16.mxu0 0
    %1425 = vmatpush1.bf16.msra.mxu0 0
    %1426 = vmatprep.subr.bf16.mxu0 0
    %1427 = vmatpush1.bf16.msra.mxu0 0
    %1428 = vmatprep.subr.bf16.mxu0 0
    %1429 = vmatpush1.bf16.msra.mxu0 0
    %1430 = vmatprep.subr.bf16.mxu0 0
    %1431 = vmatpush1.bf16.msra.mxu0 0
    %1432 = vmatprep.subr.bf16.mxu0 0
    %1433 = vmatpush1.bf16.msra.mxu0 0
    %1434 = vmatprep.subr.bf16.mxu0 0
    %1435 = vmatpush1.bf16.msra.mxu0 0
    %1436 = vmatprep.subr.bf16.mxu0 0
    %1437 = vmatpush1.bf16.msra.mxu0 0
    %1438 = vmatprep.subr.bf16.mxu0 0
    %1439 = vmatpush1.bf16.msra.mxu0 0
    %1440 = vmatprep.subr.bf16.mxu0 0
    %1441 = vmatpush1.bf16.msra.mxu0 0
    %1442 = vmatprep.subr.bf16.mxu0 0
    %1443 = vmatpush1.bf16.msra.mxu0 0
    %1444 = vmatprep.subr.bf16.mxu0 0
    %1445 = vmatpush1.bf16.msra.mxu0 0
    %1446 = vmatprep.mubr.bf16.mxu0 0
    %1447 = vmatmul.mubr.bf16.gmra.mrb[0].mxu0 %v1406
    %v1448 = vpop.f32.mrb[0].mxu0
    %v1449 = vadd.f32 0.0, %v1448
    %v1450 = vpop.f32.mrb[0].mxu0
    %v1451 = vpop.f32.mrb[0].mxu0
    %v1452 = vadd.f32 0.0, %v1451
    %v1453 = vpop.f32.mrb[0].mxu0
    %1454 = vmatprep.mubr.bf16.mxu0 0
    %1455 = vmatmul.mubr.bf16.gmra.mrb[0].mxu0 %v1409
    %v1456 = vpop.f32.mrb[0].mxu0
    %v1457 = vadd.f32 0.0, %v1456
    %v1458 = vpop.f32.mrb[0].mxu0
    %v1459 = vpop.f32.mrb[0].mxu0
    %v1460 = vadd.f32 0.0, %v1459
    %v1461 = vpop.f32.mrb[0].mxu0
    %1462 = vdwg.mxu0
    %v1463 = vmul.f32 %v1449, %v71
    %v1464 = vmul.f32 %v1452, %v72
    %v1465 = vmul.f32 %v1457, %v73
    %v1466 = vmul.f32 %v1460, %v74
    %v1467 = vadd.f32 %v1463, %v1464
    %v1468 = vadd.f32 %v1467, %v1465
    %v1469 = vadd.f32 %v1468, %v1466
    %s1470 = scalar_lea.vmem %s14, 32
    %v1471 = vld [vmem:[%s1470] sm:$0xf]
    %v1472 = vld [vmem:[%s1470 + $0x4] sm:$0xf]
    %v1473 = vld [vmem:[%s1470 + $0x8] sm:$0xf]
    %v1474 = vld [vmem:[%s1470 + $0xc] sm:$0xf]
    %v1475 = vld [vmem:[%s1470 + $0x10] sm:$0xf]
    %v1476 = vld [vmem:[%s1470 + $0x14] sm:$0xf]
    %v1477 = vld [vmem:[%s1470 + $0x18] sm:$0xf]
    %v1478 = vld [vmem:[%s1470 + $0x1c] sm:$0xf]
    %v1479 = vpack.c.bf16 %v1469, %v1469
    %v1488 = vunpack.c.l.b16 %v1471
    %v1489 = vunpack.c.l.b16 %v1472
    %v1490 = vunpack.c.l.b16 %v1473
    %v1491 = vunpack.c.l.b16 %v1474
    %v1492 = vunpack.c.l.b16 %v1475
    %v1493 = vunpack.c.l.b16 %v1476
    %v1494 = vunpack.c.l.b16 %v1477
    %v1495 = vunpack.c.l.b16 %v1478
    %v1496 = vpack.c.b16 %v1489, %v1488
    %v1497 = vpack.c.b16 %v1491, %v1490
    %v1498 = vpack.c.b16 %v1493, %v1492
    %v1499 = vpack.c.b16 %v1495, %v1494
    %v1505 = vsel %vm83, %v1479, 0
    %1507 = vmatprep.subr.bf16.mxu0 0
    %1508 = vmatpush1.bf16.msra.mxu0 %v1496
    %1509 = vmatprep.subr.bf16.mxu0 0
    %1510 = vmatpush1.bf16.msra.mxu0 %v1497
    %1511 = vmatprep.subr.bf16.mxu0 0
    %1512 = vmatpush1.bf16.msra.mxu0 %v1498
    %1513 = vmatprep.subr.bf16.mxu0 0
    %1514 = vmatpush1.bf16.msra.mxu0 %v1499
    %1515 = vmatprep.subr.bf16.mxu0 0
    %1516 = vmatpush1.bf16.msra.mxu0 0
    %1517 = vmatprep.subr.bf16.mxu0 0
    %1518 = vmatpush1.bf16.msra.mxu0 0
    %1519 = vmatprep.subr.bf16.mxu0 0
    %1520 = vmatpush1.bf16.msra.mxu0 0
    %1521 = vmatprep.subr.bf16.mxu0 0
    %1522 = vmatpush1.bf16.msra.mxu0 0
    %1523 = vmatprep.subr.bf16.mxu0 0
    %1524 = vmatpush1.bf16.msra.mxu0 0
    %1525 = vmatprep.subr.bf16.mxu0 0
    %1526 = vmatpush1.bf16.msra.mxu0 0
    %1527 = vmatprep.subr.bf16.mxu0 0
    %1528 = vmatpush1.bf16.msra.mxu0 0
    %1529 = vmatprep.subr.bf16.mxu0 0
    %1530 = vmatpush1.bf16.msra.mxu0 0
    %1531 = vmatprep.subr.bf16.mxu0 0
    %1532 = vmatpush1.bf16.msra.mxu0 0
    %1533 = vmatprep.subr.bf16.mxu0 0
    %1534 = vmatpush1.bf16.msra.mxu0 0
    %1535 = vmatprep.subr.bf16.mxu0 0
    %1536 = vmatpush1.bf16.msra.mxu0 0
    %1537 = vmatprep.subr.bf16.mxu0 0
    %1538 = vmatpush1.bf16.msra.mxu0 0
    %1539 = vmatprep.mubr.bf16.mxu0 0
    %1540 = vmatmul.mubr.bf16.gmra.mrb[0].mxu0 %v1505
    %v1541 = vpop.f32.mrb[0].mxu0
    %v1542 = vadd.f32 %v930, %v1541
    %v1543 = vpop.f32.mrb[0].mxu0
    %v1544 = vpop.f32.mrb[0].mxu0
    %v1545 = vpop.f32.mrb[0].mxu0
    %1546 = vdwg.mxu0
    %s1547 = scalar_lea.vmem %s7, 1
    %v1548 = vld [vmem:[%s1547] sm:$0x1]
    %v1549 = vmul.f32 %v1542, %v1542
    %v1550 = vsel %vm83, %v1549, 0.0
    %1551 = vadd.xlane.f32.xlu0 %v1550
    %v1552 = vpop.xlane.xlu0 %1551
    %v1553 = vmul.f32 %v1552, %v87
    %v1554 = vadd.f32 %v1553, 1e-06
    %v1555 = vrsqrt.pop %v1554
    %v1556 = vmul.f32 %v1542, %v1555
    %v1558 = vlaneseq
    %v1559 = vshrl.u32 %v1558, 7
    %v1560 = vsub.s32 0, %v1559
    %v1561 = vrot.slane %v1548, %v1560
    %v1563 = vmul.f32 %v1556, %v1561
    %s1564 = scalar_lea.vmem %s15, 64
    %v1565 = vld [vmem:[%s1564] sm:$0xff]
    %v1566 = vld [vmem:[%s1564 + $0x8] sm:$0xff]
    %v1567 = vld [vmem:[%s1564 + $0x10] sm:$0xff]
    %v1568 = vld [vmem:[%s1564 + $0x18] sm:$0xff]
    %v1569 = vld [vmem:[%s1564 + $0x20] sm:$0xff]
    %v1570 = vld [vmem:[%s1564 + $0x28] sm:$0xff]
    %v1571 = vld [vmem:[%s1564 + $0x30] sm:$0xff]
    %v1572 = vld [vmem:[%s1564 + $0x38] sm:$0xff]
    %v1573 = vpack.c.bf16 %v1563, %v1563
    %v1582 = vunpack.c.l.b16 %v1565
    %v1583 = vunpack.c.h.b16 %v1565
    %v1584 = vunpack.c.l.b16 %v1566
    %v1585 = vunpack.c.h.b16 %v1566
    %v1586 = vunpack.c.l.b16 %v1567
    %v1587 = vunpack.c.h.b16 %v1567
    %v1588 = vunpack.c.l.b16 %v1568
    %v1589 = vunpack.c.h.b16 %v1568
    %v1590 = vunpack.c.l.b16 %v1569
    %v1591 = vunpack.c.h.b16 %v1569
    %v1592 = vunpack.c.l.b16 %v1570
    %v1593 = vunpack.c.h.b16 %v1570
    %v1594 = vunpack.c.l.b16 %v1571
    %v1595 = vunpack.c.h.b16 %v1571
    %v1596 = vunpack.c.l.b16 %v1572
    %v1597 = vunpack.c.h.b16 %v1572
    %v1598 = vpack.c.b16 %v1584, %v1582
    %v1599 = vpack.c.b16 %v1585, %v1583
    %v1600 = vpack.c.b16 %v1588, %v1586
    %v1601 = vpack.c.b16 %v1589, %v1587
    %v1602 = vpack.c.b16 %v1592, %v1590
    %v1603 = vpack.c.b16 %v1593, %v1591
    %v1604 = vpack.c.b16 %v1596, %v1594
    %v1605 = vpack.c.b16 %v1597, %v1595
    %v1615 = vsel %vm83, %v1573, 0
    %1617 = vmatprep.subr.bf16.mxu0 %v1599
    %1618 = vmatpush1.bf16.msra.mxu0 %v1598
    %1619 = vmatprep.subr.bf16.mxu0 %v1601
    %1620 = vmatpush1.bf16.msra.mxu0 %v1600
    %1621 = vmatprep.subr.bf16.mxu0 %v1603
    %1622 = vmatpush1.bf16.msra.mxu0 %v1602
    %1623 = vmatprep.subr.bf16.mxu0 %v1605
    %1624 = vmatpush1.bf16.msra.mxu0 %v1604
    %1625 = vmatprep.subr.bf16.mxu0 0
    %1626 = vmatpush1.bf16.msra.mxu0 0
    %1627 = vmatprep.subr.bf16.mxu0 0
    %1628 = vmatpush1.bf16.msra.mxu0 0
    %1629 = vmatprep.subr.bf16.mxu0 0
    %1630 = vmatpush1.bf16.msra.mxu0 0
    %1631 = vmatprep.subr.bf16.mxu0 0
    %1632 = vmatpush1.bf16.msra.mxu0 0
    %1633 = vmatprep.subr.bf16.mxu0 0
    %1634 = vmatpush1.bf16.msra.mxu0 0
    %1635 = vmatprep.subr.bf16.mxu0 0
    %1636 = vmatpush1.bf16.msra.mxu0 0
    %1637 = vmatprep.subr.bf16.mxu0 0
    %1638 = vmatpush1.bf16.msra.mxu0 0
    %1639 = vmatprep.subr.bf16.mxu0 0
    %1640 = vmatpush1.bf16.msra.mxu0 0
    %1641 = vmatprep.subr.bf16.mxu0 0
    %1642 = vmatpush1.bf16.msra.mxu0 0
    %1643 = vmatprep.subr.bf16.mxu0 0
    %1644 = vmatpush1.bf16.msra.mxu0 0
    %1645 = vmatprep.subr.bf16.mxu0 0
    %1646 = vmatpush1.bf16.msra.mxu0 0
    %1647 = vmatprep.subr.bf16.mxu0 0
    %1648 = vmatpush1.bf16.msra.mxu0 0
    %1649 = vmatprep.mubr.bf16.mxu0 0
    %1650 = vmatmul.mubr.bf16.gmra.mrb[0].mxu0 %v1615
    %v1651 = vpop.f32.mrb[0].mxu0
    %v1652 = vadd.f32 0.0, %v1651
    %v1653 = vpop.f32.mrb[0].mxu0
    %v1654 = vadd.f32 0.0, %v1653
    %v1655 = vpop.f32.mrb[0].mxu0
    %v1656 = vpop.f32.mrb[0].mxu0
    %1657 = vdwg.mxu0
    %v1658 = vxor.u32 %v1652, 2147483648
    %v1659 = vmul.f32 %v1658, 1.442695
    %v1660 = vpow.pop %v1659
    %v1661 = vadd.f32 %v1660, 1.0
    %v1662 = vrcp.pop %v1661
    %v1663 = vmul.f32 1.0, %v1662
    %v1664 = vmul.f32 %v1652, %v1663
    %v1665 = vmul.f32 %v1664, %v1654
    %s1666 = scalar_lea.vmem %s16, 64
    %v1667 = vld [vmem:[%s1666] sm:$0xf]
    %v1668 = vld [vmem:[%s1666 + $0x4] sm:$0xf]
    %v1669 = vld [vmem:[%s1666 + $0x8] sm:$0xf]
    %v1670 = vld [vmem:[%s1666 + $0xc] sm:$0xf]
    %v1671 = vld [vmem:[%s1666 + $0x10] sm:$0xf]
    %v1672 = vld [vmem:[%s1666 + $0x14] sm:$0xf]
    %v1673 = vld [vmem:[%s1666 + $0x18] sm:$0xf]
    %v1674 = vld [vmem:[%s1666 + $0x1c] sm:$0xf]
    %v1675 = vld [vmem:[%s1666 + $0x20] sm:$0xf]
    %v1676 = vld [vmem:[%s1666 + $0x24] sm:$0xf]
    %v1677 = vld [vmem:[%s1666 + $0x28] sm:$0xf]
    %v1678 = vld [vmem:[%s1666 + $0x2c] sm:$0xf]
    %v1679 = vld [vmem:[%s1666 + $0x30] sm:$0xf]
    %v1680 = vld [vmem:[%s1666 + $0x34] sm:$0xf]
    %v1681 = vld [vmem:[%s1666 + $0x38] sm:$0xf]
    %v1682 = vld [vmem:[%s1666 + $0x3c] sm:$0xf]
    %v1683 = vpack.c.bf16 %v1665, %v1665
    %v1700 = vunpack.c.l.b16 %v1667
    %v1701 = vunpack.c.l.b16 %v1668
    %v1702 = vunpack.c.l.b16 %v1669
    %v1703 = vunpack.c.l.b16 %v1670
    %v1704 = vunpack.c.l.b16 %v1671
    %v1705 = vunpack.c.l.b16 %v1672
    %v1706 = vunpack.c.l.b16 %v1673
    %v1707 = vunpack.c.l.b16 %v1674
    %v1708 = vunpack.c.l.b16 %v1675
    %v1709 = vunpack.c.l.b16 %v1676
    %v1710 = vunpack.c.l.b16 %v1677
    %v1711 = vunpack.c.l.b16 %v1678
    %v1712 = vunpack.c.l.b16 %v1679
    %v1713 = vunpack.c.l.b16 %v1680
    %v1714 = vunpack.c.l.b16 %v1681
    %v1715 = vunpack.c.l.b16 %v1682
    %v1716 = vpack.c.b16 %v1701, %v1700
    %v1717 = vpack.c.b16 %v1703, %v1702
    %v1718 = vpack.c.b16 %v1705, %v1704
    %v1719 = vpack.c.b16 %v1707, %v1706
    %v1720 = vpack.c.b16 %v1709, %v1708
    %v1721 = vpack.c.b16 %v1711, %v1710
    %v1722 = vpack.c.b16 %v1713, %v1712
    %v1723 = vpack.c.b16 %v1715, %v1714
    %1732 = vmatprep.subr.bf16.mxu0 0
    %1733 = vmatpush1.bf16.msra.mxu0 %v1716
    %1734 = vmatprep.subr.bf16.mxu0 0
    %1735 = vmatpush1.bf16.msra.mxu0 %v1717
    %1736 = vmatprep.subr.bf16.mxu0 0
    %1737 = vmatpush1.bf16.msra.mxu0 %v1718
    %1738 = vmatprep.subr.bf16.mxu0 0
    %1739 = vmatpush1.bf16.msra.mxu0 %v1719
    %1740 = vmatprep.subr.bf16.mxu0 0
    %1741 = vmatpush1.bf16.msra.mxu0 %v1720
    %1742 = vmatprep.subr.bf16.mxu0 0
    %1743 = vmatpush1.bf16.msra.mxu0 %v1721
    %1744 = vmatprep.subr.bf16.mxu0 0
    %1745 = vmatpush1.bf16.msra.mxu0 %v1722
    %1746 = vmatprep.subr.bf16.mxu0 0
    %1747 = vmatpush1.bf16.msra.mxu0 %v1723
    %1748 = vmatprep.subr.bf16.mxu0 0
    %1749 = vmatpush1.bf16.msra.mxu0 0
    %1750 = vmatprep.subr.bf16.mxu0 0
    %1751 = vmatpush1.bf16.msra.mxu0 0
    %1752 = vmatprep.subr.bf16.mxu0 0
    %1753 = vmatpush1.bf16.msra.mxu0 0
    %1754 = vmatprep.subr.bf16.mxu0 0
    %1755 = vmatpush1.bf16.msra.mxu0 0
    %1756 = vmatprep.subr.bf16.mxu0 0
    %1757 = vmatpush1.bf16.msra.mxu0 0
    %1758 = vmatprep.subr.bf16.mxu0 0
    %1759 = vmatpush1.bf16.msra.mxu0 0
    %1760 = vmatprep.subr.bf16.mxu0 0
    %1761 = vmatpush1.bf16.msra.mxu0 0
    %1762 = vmatprep.subr.bf16.mxu0 0
    %1763 = vmatpush1.bf16.msra.mxu0 0
    %1764 = vmatprep.mubr.bf16.mxu0 0
    %1765 = vmatmul.mubr.bf16.gmra.mrb[0].mxu0 %v1683
    %v1766 = vpop.f32.mrb[0].mxu0
    %v1767 = vadd.f32 %v1542, %v1766
    %v1768 = vpop.f32.mrb[0].mxu0
    %v1769 = vpop.f32.mrb[0].mxu0
    %v1770 = vpop.f32.mrb[0].mxu0
    %1771 = vdwg.mxu0
    %v1772 = vld [vmem:[%s17] sm:$0x1]
    %v1773 = vmul.f32 %v1767, %v1767
    %v1774 = vsel %vm83, %v1773, 0.0
    %1775 = vadd.xlane.f32.xlu0 %v1774
    %v1776 = vpop.xlane.xlu0 %1775
    %v1777 = vmul.f32 %v1776, %v87
    %v1778 = vadd.f32 %v1777, 1e-06
    %v1779 = vrsqrt.pop %v1778
    %v1780 = vmul.f32 %v1767, %v1779
    %v1782 = vlaneseq
    %v1783 = vshrl.u32 %v1782, 7
    %v1784 = vsub.s32 0, %v1783
    %v1785 = vrot.slane %v1772, %v1784
    %v1787 = vmul.f32 %v1780, %v1785
    %1788 = vst.msk [vmem:[#allocation2] sm:$0xff] %vm83, %v1787
    // Predicated region
    $region74: #{_lambda_.1} parent=1 // pred_check
      _
    $region75: #{_lambda_.1} parent=1 // pred_check_branch
      %1790 = sbr.rel (0) target = $region77
    $region76: #{_lambda_.1} parent=1 // pred_region
      %s1792 = ssub.s32 128, 128
      %1793 = vsyncadd [#allocation3], %s1792
      %s1795 = sshll.u32 [#allocation2], 4
      %s1796 = int_to_ptr.vmem [resolvable:$true] %s1795
      %1798 = dma.vmem_to_hbm [thread:$0]  %s1796, 128, %s18, [#allocation3]
    $region77: #{_lambda_.1} parent=1 // pred_fallthru
      _
    // Predicated region
    $region78: #{_lambda_.1} parent=1 // pred_check
      _
    $region79: #{_lambda_.1} parent=1 // pred_check_branch
      %1800 = sbr.rel (0) target = $region81
    $region80: #{_lambda_.1} parent=1 // pred_region
      %1801 = dma.done [#allocation3], 128
    $region81: #{_lambda_.1} parent=1 // pred_fallthru
      _
    %1802 = vsyncpa [#allocation3], 1

</llo_original>
